<compile_context>
chip_gen: v6e
topology: v6e:2x2x1
jax: 0.10.0
libtpu: 0.0.40
codegen_flags: <defaults>
</compile_context>

<pallas_src>
import functools
import math

import jax
import jax.numpy as jnp
import numpy as np
from jax.experimental import pallas as pl
from jax.experimental.pallas import tpu as pltpu

_HEAD_LANES = 128      # per-head score slab is padded to one full lane register
_NEG_INF = -1e30       # additive mask for padded key rows (finite -> no NaN)


def _attn_pool_kernel(x_ref, pos_ref, negmask_ref, seg_ref, segt_ref,
                      qw_ref, qb_ref, kw_ref, kb_ref, vw_ref, vb_ref,
                      cw_ref, cb_ref, o_ref, tok_ref, *, heads):
    bt, hw, c = x_ref.shape            # images per grid step, spatial tokens, embed dim
    l = hw + 1                         # +1 mean token
    l_pad = tok_ref.shape[0] // bt     # token rows per image (bf16 sublane aligned)
    d = c // heads
    scale = 1.0 / math.sqrt(d)
    rows = bt * l_pad

    x = x_ref[...].astype(jnp.float32)                           # (bt, HW, C)
    pos = pos_ref[...].astype(jnp.float32)                       # (L, C)

    # Query row per image: spatial mean (f32 accumulation) + pos[0].
    means = jnp.mean(x, axis=1)                                  # (bt, C)
    q_toks_bf = (means + pos[0:1, :]).astype(jnp.bfloat16)       # (bt, C)

    # Key/value token slab, one L_PAD-row block per image:
    #   rows [0:HW]    = x + pos[1:]   (sublane-aligned bulk store)
    #   row  HW        = mean + pos[0] (keys are order invariant)
    #   rows [L:L_PAD] = 0             (masked out of the softmax below)
    x_pos = (x + pos[1:l, :][None, :, :]).astype(jnp.bfloat16)
    for b in range(bt):
        base = b * l_pad
        tok_ref[base:base + hw, :] = x_pos[b]
        tok_ref[base + hw:base + hw + 1, :] = q_toks_bf[b:b + 1, :]
        if l_pad > l:
            tok_ref[base + l:base + l_pad, :] = jnp.zeros((l_pad - l, c), jnp.bfloat16)
    toks = tok_ref[...]                                          # (rows, C) bf16

    # Projections: single big bf16 matmuls, f32 MXU accumulation.
    k = jnp.dot(toks, kw_ref[...], preferred_element_type=jnp.float32) + kb_ref[...]
    v = jnp.dot(toks, vw_ref[...], preferred_element_type=jnp.float32) + vb_ref[...]
    q = (jnp.dot(q_toks_bf, qw_ref[...], preferred_element_type=jnp.float32)
         + qb_ref[...]) * scale                                  # (bt, C)

    # Per-head scores on a small (rows, 128) slab:
    #   s[b, l, h] = sum_d k[b, l, h*D + d] * q[b, h*D + d]
    # k*q with a per-image broadcast, then reduce each head's D lanes via the
    # tiny precomputed (C, 128) 0/1 segment matrix.
    kq = (k.reshape(bt, l_pad, c) * q[:, None, :]).reshape(rows, c)
    s = jnp.dot(kq.astype(jnp.bfloat16), seg_ref[...],
                preferred_element_type=jnp.float32)              # (rows, 128)
    s = s.reshape(bt, l_pad, _HEAD_LANES) + negmask_ref[...][None, :, :]

    # Softmax over keys (axis 1), per image and per head.
    m = jnp.max(s, axis=1, keepdims=True)                        # (bt, 1, 128)
    e = jnp.exp(s - m)
    denom = jnp.sum(e, axis=1, keepdims=True)
    p = e * pl.reciprocal(denom, approx=True)                    # (bt, L_PAD, 128)

    # Expand per-head weights back to (rows, C) and take the weighted sum of v.
    pexp = jnp.dot(p.reshape(rows, _HEAD_LANES).astype(jnp.bfloat16), segt_ref[...],
                   preferred_element_type=jnp.float32)           # (rows, C)
    attn = jnp.sum((pexp * v).reshape(bt, l_pad, c), axis=1)     # (bt, C)

    out = jnp.dot(attn.astype(jnp.bfloat16), cw_ref[...],
                  preferred_element_type=jnp.float32) + cb_ref[...]
    o_ref[...] = out.astype(o_ref.dtype)


def _resident_spec(arr):
    """Grid-invariant operand: constant index map, single VMEM buffer."""
    index_map = lambda g: (0,) * arr.ndim
    try:
        return pl.BlockSpec(arr.shape, index_map, pipeline_mode=pl.Buffered(1))
    except Exception:  # older jax without BlockSpec.pipeline_mode -> default buffering
        return pl.BlockSpec(arr.shape, index_map)


def attention_pool2d(x_nchw, params, num_heads, *, b_tile=8):
    """x_nchw: (B, C, H, W). Returns (B, output_dim), like the PyTorch module."""
    B, C, H, W = x_nchw.shape
    assert C % num_heads == 0 and num_heads <= _HEAD_LANES
    HW = H * W
    L = HW + 1
    D = C // num_heads
    out_dim = params['c_w'].shape[1]
    L_PAD = ((L + 15) // 16) * 16          # bf16 sublane-tile aligned rows per image

    # Images per grid step: largest divisor of B not exceeding b_tile.
    bt = max(1, min(b_tile, B))
    while B % bt:
        bt -= 1

    # bf16 activations at the boundary halve the per-step HBM->VMEM DMA.
    x_bsc = jnp.transpose(x_nchw.reshape(B, C, HW), (0, 2, 1)).astype(jnp.bfloat16)
    pos = params['pos'].astype(jnp.bfloat16)

    # Trace-time constants (never rebuilt inside the grid-loop body):
    #   seg  (C, 128): column h is 1 on head h's D lanes  -> per-head score reduce
    #   segt (128, C): transpose                          -> per-head prob expand
    #   negmask (L_PAD, 128): 0 on valid key rows, -1e30 on pad rows
    head_of_lane = jnp.arange(C) // D
    head_ids = jnp.arange(_HEAD_LANES)
    seg = (head_of_lane[:, None] == head_ids[None, :]).astype(jnp.bfloat16)
    segt = (head_ids[:, None] == head_of_lane[None, :]).astype(jnp.bfloat16)
    row_ok = jnp.broadcast_to(jnp.arange(L_PAD)[:, None] < L, (L_PAD, _HEAD_LANES))
    negmask = jnp.where(row_ok, 0.0, _NEG_INF).astype(jnp.float32)

    kernel = functools.partial(_attn_pool_kernel, heads=num_heads)

    out = pl.pallas_call(
        kernel,
        out_shape=jax.ShapeDtypeStruct((B // bt, bt, out_dim), jnp.float32),
        grid=(B // bt,),
        in_specs=[
            pl.BlockSpec((bt, HW, C), lambda g: (g, 0, 0)),      # x: double-buffered
            _resident_spec(pos), _resident_spec(negmask),
            _resident_spec(seg), _resident_spec(segt),
            _resident_spec(params['q_w']), _resident_spec(params['q_b']),
            _resident_spec(params['k_w']), _resident_spec(params['k_b']),
            _resident_spec(params['v_w']), _resident_spec(params['v_b']),
            _resident_spec(params['c_w']), _resident_spec(params['c_b']),
        ],
        out_specs=pl.BlockSpec((pl.Squeezed(), bt, out_dim), lambda g: (g, 0, 0)),
        scratch_shapes=[pltpu.VMEM((bt * L_PAD, C), jnp.bfloat16)],   # token slab
        compiler_params=pltpu.CompilerParams(
            dimension_semantics=("parallel",),
            vmem_limit_bytes=64 * 1024 * 1024),
    )(x_bsc, pos, negmask, seg, segt,
      params['q_w'], params['q_b'], params['k_w'], params['k_b'],
      params['v_w'], params['v_b'], params['c_w'], params['c_b'])
    return out.reshape(B, out_dim)


# ------------------------ params & pure-JAX reference ------------------------

def init_params(key, spacial_dim, embed_dim, output_dim):
    C = embed_dim
    L = spacial_dim ** 2 + 1
    ks = jax.random.split(key, 9)
    bf = jnp.bfloat16
    return {
        'pos': jax.random.normal(ks[0], (L, C), jnp.float32) / C ** 0.5,
        # linear weights stored pre-transposed (in_features, out_features), bf16
        'q_w': (0.05 * jax.random.normal(ks[1], (C, C), jnp.float32)).astype(bf),
        'q_b': 0.02 * jax.random.normal(ks[2], (1, C), jnp.float32),
        'k_w': (0.05 * jax.random.normal(ks[3], (C, C), jnp.float32)).astype(bf),
        'k_b': 0.02 * jax.random.normal(ks[4], (1, C), jnp.float32),
        'v_w': (0.05 * jax.random.normal(ks[5], (C, C), jnp.float32)).astype(bf),
        'v_b': 0.02 * jax.random.normal(ks[6], (1, C), jnp.float32),
        'c_w': (0.05 * jax.random.normal(ks[7], (C, output_dim), jnp.float32)).astype(bf),
        'c_b': 0.02 * jax.random.normal(ks[8], (1, output_dim), jnp.float32),
    }


def attention_pool2d_reference(x_nchw, params, num_heads):
    """Pure-JAX fp32 mirror of the F.multi_head_attention_forward path (dropout=0)."""
    B, C, H, W = x_nchw.shape
    HW = H * W
    L = HW + 1
    D = C // num_heads

    x = jnp.transpose(x_nchw.reshape(B, C, HW), (0, 2, 1))          # (B, HW, C)
    toks = jnp.concatenate([x.mean(axis=1, keepdims=True), x], axis=1)
    toks = toks + params['pos'][None]                                # (B, L, C)

    qw = params['q_w'].astype(jnp.float32)
    kw = params['k_w'].astype(jnp.float32)
    vw = params['v_w'].astype(jnp.float32)
    cw = params['c_w'].astype(jnp.float32)

    q = toks[:, 0:1, :] @ qw + params['q_b']                         # (B, 1, C)
    k = toks @ kw + params['k_b']                                    # (B, L, C)
    v = toks @ vw + params['v_b']                                    # (B, L, C)

    q = q.reshape(B, 1, num_heads, D).transpose(0, 2, 1, 3) / math.sqrt(D)
    k = k.reshape(B, L, num_heads, D).transpose(0, 2, 1, 3)
    v = v.reshape(B, L, num_heads, D).transpose(0, 2, 1, 3)

    s = jnp.einsum('bhqd,bhkd->bhqk', q, k)
    p = jax.nn.softmax(s, axis=-1)
    a = jnp.einsum('bhqk,bhkd->bhqd', p, v).transpose(0, 2, 1, 3).reshape(B, 1, C)
    out = a @ cw + params['c_b']                                     # (B, 1, out_dim)
    return out[:, 0, :]


if __name__ == "__main__":
    # Small test shapes; for performance work benchmark at CLIP sizes
    # (HW=49, C=2048, heads=32, out_dim=1024) instead.
    B, C, H, W = 4, 64, 4, 4      # batch, embed_dim, spatial
    heads = 4
    output_dim = 128

    key = jax.random.PRNGKey(0)
    kx, kp = jax.random.split(key)
    x = jax.random.normal(kx, (B, C, H, W), jnp.float32)
    params = init_params(kp, spacial_dim=H, embed_dim=C, output_dim=output_dim)

    out = attention_pool2d(x, params, heads, b_tile=2)   # grid = 2 parallel steps
    out = jax.block_until_ready(out)

    ref = attention_pool2d_reference(x, params, heads)
    assert out.shape == (B, output_dim)
    # bf16 activation/weight casts + approx reciprocal in-kernel -> loose tolerance
    np.testing.assert_allclose(np.asarray(out), np.asarray(ref), rtol=2e-2, atol=2e-2)

    print("KERNEL_OK")
</pallas_src>

<mosaic_0001>
module attributes {stable_mosaic.version = 11 : i64} {
  func.func @_attn_pool_kernel(%arg0: i32, %arg1: memref<2x16x64xbf16, #tpu.memory_space<vmem>>, %arg2: memref<17x64xbf16, #tpu.memory_space<vmem>>, %arg3: memref<32x128xf32, #tpu.memory_space<vmem>>, %arg4: memref<64x128xbf16, #tpu.memory_space<vmem>>, %arg5: memref<128x64xbf16, #tpu.memory_space<vmem>>, %arg6: memref<64x64xbf16, #tpu.memory_space<vmem>>, %arg7: memref<1x64xf32, #tpu.memory_space<vmem>>, %arg8: memref<64x64xbf16, #tpu.memory_space<vmem>>, %arg9: memref<1x64xf32, #tpu.memory_space<vmem>>, %arg10: memref<64x64xbf16, #tpu.memory_space<vmem>>, %arg11: memref<1x64xf32, #tpu.memory_space<vmem>>, %arg12: memref<64x128xbf16, #tpu.memory_space<vmem>>, %arg13: memref<1x128xf32, #tpu.memory_space<vmem>>, %arg14: memref<1x2x128xf32, #tpu.memory_space<vmem>>, %arg15: memref<64x64xbf16, #tpu.memory_space<vmem>>) attributes {dimension_semantics = [#tpu.dimension_semantics<parallel>], iteration_bounds = array<i64: 2>, scalar_prefetch = 0 : i64, scratch_operands = 1 : i64, tpu.core_type = #tpu.core_type<tc>, window_params = [{transform_indices = @transform_0, window_bounds = array<i64: 2, 16, 64>}, {pipeline_mode = #tpu.pipeline_mode<synchronous>, transform_indices = @transform_1, window_bounds = array<i64: 17, 64>}, {pipeline_mode = #tpu.pipeline_mode<synchronous>, transform_indices = @transform_2, window_bounds = array<i64: 32, 128>}, {pipeline_mode = #tpu.pipeline_mode<synchronous>, transform_indices = @transform_3, window_bounds = array<i64: 64, 128>}, {pipeline_mode = #tpu.pipeline_mode<synchronous>, transform_indices = @transform_4, window_bounds = array<i64: 128, 64>}, {pipeline_mode = #tpu.pipeline_mode<synchronous>, transform_indices = @transform_5, window_bounds = array<i64: 64, 64>}, {pipeline_mode = #tpu.pipeline_mode<synchronous>, transform_indices = @transform_6, window_bounds = array<i64: 1, 64>}, {pipeline_mode = #tpu.pipeline_mode<synchronous>, transform_indices = @transform_7, window_bounds = array<i64: 64, 64>}, {pipeline_mode = #tpu.pipeline_mode<synchronous>, transform_indices = @transform_8, window_bounds = array<i64: 1, 64>}, {pipeline_mode = #tpu.pipeline_mode<synchronous>, transform_indices = @transform_9, window_bounds = array<i64: 64, 64>}, {pipeline_mode = #tpu.pipeline_mode<synchronous>, transform_indices = @transform_10, window_bounds = array<i64: 1, 64>}, {pipeline_mode = #tpu.pipeline_mode<synchronous>, transform_indices = @transform_11, window_bounds = array<i64: 64, 128>}, {pipeline_mode = #tpu.pipeline_mode<synchronous>, transform_indices = @transform_12, window_bounds = array<i64: 1, 128>}, {transform_indices = @transform_13, window_bounds = array<i64: 1, 2, 128>}]} {
    %c0 = arith.constant 0 : index
    %c0_0 = arith.constant 0 : index
    %c0_1 = arith.constant 0 : index
    %0 = vector.load %arg1[%c0, %c0_0, %c0_1] : memref<2x16x64xbf16, #tpu.memory_space<vmem>>, vector<2x16x64xbf16>
    %1 = arith.extf %0 : vector<2x16x64xbf16> to vector<2x16x64xf32>
    %c0_2 = arith.constant 0 : index
    %c0_3 = arith.constant 0 : index
    %2 = vector.load %arg2[%c0_2, %c0_3] : memref<17x64xbf16, #tpu.memory_space<vmem>>, vector<17x64xbf16>
    %3 = arith.extf %2 : vector<17x64xbf16> to vector<17x64xf32>
    %cst = arith.constant dense<0.000000e+00> : vector<2x64xf32>
    %4 = vector.multi_reduction <add>, %1, %cst [1] : vector<2x16x64xf32> to vector<2x64xf32>
    %cst_4 = arith.constant 1.600000e+01 : f32
    %5 = vector.broadcast %cst_4 : f32 to vector<2x64xf32>
    %6 = arith.divf %4, %5 : vector<2x64xf32>
    %7 = vector.extract_strided_slice %3 {offsets = [0, 0], sizes = [1, 64], strides = [1, 1]} : vector<17x64xf32> to vector<1x64xf32>
    %8 = vector.broadcast %7 : vector<1x64xf32> to vector<2x64xf32>
    %9 = arith.addf %6, %8 : vector<2x64xf32>
    %10 = arith.truncf %9 : vector<2x64xf32> to vector<2x64xbf16>
    %11 = vector.extract_strided_slice %3 {offsets = [1, 0], sizes = [16, 64], strides = [1, 1]} : vector<17x64xf32> to vector<16x64xf32>
    %12 = vector.shape_cast %11 : vector<16x64xf32> to vector<1x16x64xf32>
    %13 = vector.broadcast %12 : vector<1x16x64xf32> to vector<2x16x64xf32>
    %14 = arith.addf %1, %13 : vector<2x16x64xf32>
    %15 = arith.truncf %14 : vector<2x16x64xf32> to vector<2x16x64xbf16>
    %16 = vector.extract_strided_slice %15 {offsets = [0, 0, 0], sizes = [1, 16, 64], strides = [1, 1, 1]} : vector<2x16x64xbf16> to vector<1x16x64xbf16>
    %17 = vector.shape_cast %16 : vector<1x16x64xbf16> to vector<16x64xbf16>
    %c0_5 = arith.constant 0 : index
    %c0_6 = arith.constant 0 : index
    %18 = vector.load %arg15[%c0_5, %c0_6] : memref<64x64xbf16, #tpu.memory_space<vmem>>, vector<16x64xbf16>
    tpu.vector_store %arg15[%c0_5, %c0_6], %17 {strides = array<i32>} : memref<64x64xbf16, #tpu.memory_space<vmem>>, vector<16x64xbf16>,
    %19 = vector.extract_strided_slice %10 {offsets = [0, 0], sizes = [1, 64], strides = [1, 1]} : vector<2x64xbf16> to vector<1x64xbf16>
    %c16 = arith.constant 16 : index
    %c0_7 = arith.constant 0 : index
    %20 = vector.load %arg15[%c16, %c0_7] : memref<64x64xbf16, #tpu.memory_space<vmem>>, vector<1x64xbf16>
    tpu.vector_store %arg15[%c16, %c0_7], %19 {strides = array<i32>} : memref<64x64xbf16, #tpu.memory_space<vmem>>, vector<1x64xbf16>,
    %cst_8 = arith.constant 0.000000e+00 : bf16
    %21 = vector.broadcast %cst_8 : bf16 to vector<15x64xbf16>
    %c17 = arith.constant 17 : index
    %c0_9 = arith.constant 0 : index
    %22 = vector.load %arg15[%c17, %c0_9] : memref<64x64xbf16, #tpu.memory_space<vmem>>, vector<15x64xbf16>
    tpu.vector_store %arg15[%c17, %c0_9], %21 {strides = array<i32>} : memref<64x64xbf16, #tpu.memory_space<vmem>>, vector<15x64xbf16>,
    %23 = vector.extract_strided_slice %15 {offsets = [1, 0, 0], sizes = [1, 16, 64], strides = [1, 1, 1]} : vector<2x16x64xbf16> to vector<1x16x64xbf16>
    %24 = vector.shape_cast %23 : vector<1x16x64xbf16> to vector<16x64xbf16>
    %c32 = arith.constant 32 : index
    %c0_10 = arith.constant 0 : index
    %25 = vector.load %arg15[%c32, %c0_10] : memref<64x64xbf16, #tpu.memory_space<vmem>>, vector<16x64xbf16>
    tpu.vector_store %arg15[%c32, %c0_10], %24 {strides = array<i32>} : memref<64x64xbf16, #tpu.memory_space<vmem>>, vector<16x64xbf16>,
    %26 = vector.extract_strided_slice %10 {offsets = [1, 0], sizes = [1, 64], strides = [1, 1]} : vector<2x64xbf16> to vector<1x64xbf16>
    %c48 = arith.constant 48 : index
    %c0_11 = arith.constant 0 : index
    %27 = vector.load %arg15[%c48, %c0_11] : memref<64x64xbf16, #tpu.memory_space<vmem>>, vector<1x64xbf16>
    tpu.vector_store %arg15[%c48, %c0_11], %26 {strides = array<i32>} : memref<64x64xbf16, #tpu.memory_space<vmem>>, vector<1x64xbf16>,
    %cst_12 = arith.constant 0.000000e+00 : bf16
    %28 = vector.broadcast %cst_12 : bf16 to vector<15x64xbf16>
    %c49 = arith.constant 49 : index
    %c0_13 = arith.constant 0 : index
    %29 = vector.load %arg15[%c49, %c0_13] : memref<64x64xbf16, #tpu.memory_space<vmem>>, vector<15x64xbf16>
    tpu.vector_store %arg15[%c49, %c0_13], %28 {strides = array<i32>} : memref<64x64xbf16, #tpu.memory_space<vmem>>, vector<15x64xbf16>,
    %c0_14 = arith.constant 0 : index
    %c0_15 = arith.constant 0 : index
    %30 = vector.load %arg15[%c0_14, %c0_15] : memref<64x64xbf16, #tpu.memory_space<vmem>>, vector<64x64xbf16>
    %c0_16 = arith.constant 0 : index
    %c0_17 = arith.constant 0 : index
    %31 = vector.load %arg8[%c0_16, %c0_17] : memref<64x64xbf16, #tpu.memory_space<vmem>>, vector<64x64xbf16>
    %cst_18 = arith.constant dense<0.000000e+00> : vector<64x64xf32>
    %32 = tpu.matmul %30, %31, %cst_18 {dimension_numbers = #tpu.dot_dimension_numbers<[1], [0], [0], [1], [0, 0, 1, 1], [], []>} : vector<64x64xbf16>, vector<64x64xbf16>, vector<64x64xf32> -> vector<64x64xf32>
    %c0_19 = arith.constant 0 : index
    %c0_20 = arith.constant 0 : index
    %33 = vector.load %arg9[%c0_19, %c0_20] : memref<1x64xf32, #tpu.memory_space<vmem>>, vector<1x64xf32>
    %34 = vector.broadcast %33 : vector<1x64xf32> to vector<64x64xf32>
    %35 = arith.addf %32, %34 : vector<64x64xf32>
    %c0_21 = arith.constant 0 : index
    %c0_22 = arith.constant 0 : index
    %36 = vector.load %arg10[%c0_21, %c0_22] : memref<64x64xbf16, #tpu.memory_space<vmem>>, vector<64x64xbf16>
    %cst_23 = arith.constant dense<0.000000e+00> : vector<64x64xf32>
    %37 = tpu.matmul %30, %36, %cst_23 {dimension_numbers = #tpu.dot_dimension_numbers<[1], [0], [0], [1], [0, 0, 1, 1], [], []>} : vector<64x64xbf16>, vector<64x64xbf16>, vector<64x64xf32> -> vector<64x64xf32>
    %c0_24 = arith.constant 0 : index
    %c0_25 = arith.constant 0 : index
    %38 = vector.load %arg11[%c0_24, %c0_25] : memref<1x64xf32, #tpu.memory_space<vmem>>, vector<1x64xf32>
    %39 = vector.broadcast %38 : vector<1x64xf32> to vector<64x64xf32>
    %40 = arith.addf %37, %39 : vector<64x64xf32>
    %c0_26 = arith.constant 0 : index
    %c0_27 = arith.constant 0 : index
    %41 = vector.load %arg6[%c0_26, %c0_27] : memref<64x64xbf16, #tpu.memory_space<vmem>>, vector<64x64xbf16>
    %cst_28 = arith.constant dense<0.000000e+00> : vector<2x64xf32>
    %42 = tpu.matmul %10, %41, %cst_28 {dimension_numbers = #tpu.dot_dimension_numbers<[1], [0], [0], [1], [0, 0, 1, 1], [], []>} : vector<2x64xbf16>, vector<64x64xbf16>, vector<2x64xf32> -> vector<2x64xf32>
    %c0_29 = arith.constant 0 : index
    %c0_30 = arith.constant 0 : index
    %43 = vector.load %arg7[%c0_29, %c0_30] : memref<1x64xf32, #tpu.memory_space<vmem>>, vector<1x64xf32>
    %44 = vector.broadcast %43 : vector<1x64xf32> to vector<2x64xf32>
    %45 = arith.addf %42, %44 : vector<2x64xf32>
    %cst_31 = arith.constant 2.500000e-01 : f32
    %46 = vector.broadcast %cst_31 : f32 to vector<2x64xf32>
    %47 = arith.mulf %45, %46 : vector<2x64xf32>
    %48 = vector.shape_cast %35 : vector<64x64xf32> to vector<2x32x64xf32>
    %49 = vector.shape_cast %47 : vector<2x64xf32> to vector<2x1x64xf32>
    %50 = vector.broadcast %49 : vector<2x1x64xf32> to vector<2x32x64xf32>
    %51 = arith.mulf %48, %50 : vector<2x32x64xf32>
    %52 = vector.shape_cast %51 : vector<2x32x64xf32> to vector<64x64xf32>
    %53 = arith.truncf %52 : vector<64x64xf32> to vector<64x64xbf16>
    %c0_32 = arith.constant 0 : index
    %c0_33 = arith.constant 0 : index
    %54 = vector.load %arg4[%c0_32, %c0_33] : memref<64x128xbf16, #tpu.memory_space<vmem>>, vector<64x128xbf16>
    %cst_34 = arith.constant dense<0.000000e+00> : vector<64x128xf32>
    %55 = tpu.matmul %53, %54, %cst_34 {dimension_numbers = #tpu.dot_dimension_numbers<[1], [0], [0], [1], [0, 0, 1, 1], [], []>} : vector<64x64xbf16>, vector<64x128xbf16>, vector<64x128xf32> -> vector<64x128xf32>
    %56 = vector.shape_cast %55 : vector<64x128xf32> to vector<2x32x128xf32>
    %c0_35 = arith.constant 0 : index
    %c0_36 = arith.constant 0 : index
    %57 = vector.load %arg3[%c0_35, %c0_36] : memref<32x128xf32, #tpu.memory_space<vmem>>, vector<32x128xf32>
    %58 = vector.shape_cast %57 : vector<32x128xf32> to vector<1x32x128xf32>
    %59 = vector.broadcast %58 : vector<1x32x128xf32> to vector<2x32x128xf32>
    %60 = arith.addf %56, %59 : vector<2x32x128xf32>
    %cst_37 = arith.constant dense<0xFF800000> : vector<2x128xf32>
    %61 = vector.multi_reduction <maximumf>, %60, %cst_37 [1] : vector<2x32x128xf32> to vector<2x128xf32>
    %62 = vector.shape_cast %61 : vector<2x128xf32> to vector<2x1x128xf32>
    %63 = vector.broadcast %62 : vector<2x1x128xf32> to vector<2x32x128xf32>
    %64 = arith.subf %60, %63 : vector<2x32x128xf32>
    %65 = math.exp %64 : vector<2x32x128xf32>
    %cst_38 = arith.constant dense<0.000000e+00> : vector<2x128xf32>
    %66 = vector.multi_reduction <add>, %65, %cst_38 [1] : vector<2x32x128xf32> to vector<2x128xf32>
    %67 = vector.shape_cast %66 : vector<2x128xf32> to vector<2x1x128xf32>
    %68 = tpu.reciprocal %67 {approx = true} : vector<2x1x128xf32> -> vector<2x1x128xf32>
    %69 = vector.broadcast %68 : vector<2x1x128xf32> to vector<2x32x128xf32>
    %70 = arith.mulf %65, %69 : vector<2x32x128xf32>
    %71 = vector.shape_cast %70 : vector<2x32x128xf32> to vector<64x128xf32>
    %72 = arith.truncf %71 : vector<64x128xf32> to vector<64x128xbf16>
    %c0_39 = arith.constant 0 : index
    %c0_40 = arith.constant 0 : index
    %73 = vector.load %arg5[%c0_39, %c0_40] : memref<128x64xbf16, #tpu.memory_space<vmem>>, vector<128x64xbf16>
    %cst_41 = arith.constant dense<0.000000e+00> : vector<64x64xf32>
    %74 = tpu.matmul %72, %73, %cst_41 {dimension_numbers = #tpu.dot_dimension_numbers<[1], [0], [0], [1], [0, 0, 1, 1], [], []>} : vector<64x128xbf16>, vector<128x64xbf16>, vector<64x64xf32> -> vector<64x64xf32>
    %75 = arith.mulf %74, %40 : vector<64x64xf32>
    %76 = vector.shape_cast %75 : vector<64x64xf32> to vector<2x32x64xf32>
    %cst_42 = arith.constant dense<0.000000e+00> : vector<2x64xf32>
    %77 = vector.multi_reduction <add>, %76, %cst_42 [1] : vector<2x32x64xf32> to vector<2x64xf32>
    %78 = arith.truncf %77 : vector<2x64xf32> to vector<2x64xbf16>
    %c0_43 = arith.constant 0 : index
    %c0_44 = arith.constant 0 : index
    %79 = vector.load %arg12[%c0_43, %c0_44] : memref<64x128xbf16, #tpu.memory_space<vmem>>, vector<64x128xbf16>
    %cst_45 = arith.constant dense<0.000000e+00> : vector<2x128xf32>
    %80 = tpu.matmul %78, %79, %cst_45 {dimension_numbers = #tpu.dot_dimension_numbers<[1], [0], [0], [1], [0, 0, 1, 1], [], []>} : vector<2x64xbf16>, vector<64x128xbf16>, vector<2x128xf32> -> vector<2x128xf32>
    %c0_46 = arith.constant 0 : index
    %c0_47 = arith.constant 0 : index
    %81 = vector.load %arg13[%c0_46, %c0_47] : memref<1x128xf32, #tpu.memory_space<vmem>>, vector<1x128xf32>
    %82 = vector.broadcast %81 : vector<1x128xf32> to vector<2x128xf32>
    %83 = arith.addf %80, %82 : vector<2x128xf32>
    %c0_48 = arith.constant 0 : index
    %c0_49 = arith.constant 0 : index
    %c0_50 = arith.constant 0 : index
    %84 = vector.load %arg14[%c0_48, %c0_49, %c0_50] : memref<1x2x128xf32, #tpu.memory_space<vmem>>, vector<1x2x128xf32>
    %85 = vector.shape_cast %84 : vector<1x2x128xf32> to vector<2x128xf32>
    %86 = vector.shape_cast %83 : vector<2x128xf32> to vector<1x2x128xf32>
    tpu.vector_store %arg14[%c0_48, %c0_49, %c0_50], %86 {strides = array<i32>} : memref<1x2x128xf32, #tpu.memory_space<vmem>>, vector<1x2x128xf32>,
    return
  }
  func.func @transform_0(%arg0: i32) -> (i32, i32, i32) {
    %c0_i32 = arith.constant 0 : i32
    %c0_i32_0 = arith.constant 0 : i32
    %c0_i32_1 = arith.constant 0 : i32
    return %arg0, %c0_i32, %c0_i32_0 : i32, i32, i32
  }
  func.func @transform_1(%arg0: i32) -> (i32, i32) {
    %c0_i32 = arith.constant 0 : i32
    %c0_i32_0 = arith.constant 0 : i32
    %c0_i32_1 = arith.constant 0 : i32
    return %c0_i32, %c0_i32_0 : i32, i32
  }
  func.func @transform_2(%arg0: i32) -> (i32, i32) {
    %c0_i32 = arith.constant 0 : i32
    %c0_i32_0 = arith.constant 0 : i32
    %c0_i32_1 = arith.constant 0 : i32
    return %c0_i32, %c0_i32_0 : i32, i32
  }
  func.func @transform_3(%arg0: i32) -> (i32, i32) {
    %c0_i32 = arith.constant 0 : i32
    %c0_i32_0 = arith.constant 0 : i32
    %c0_i32_1 = arith.constant 0 : i32
    return %c0_i32, %c0_i32_0 : i32, i32
  }
  func.func @transform_4(%arg0: i32) -> (i32, i32) {
    %c0_i32 = arith.constant 0 : i32
    %c0_i32_0 = arith.constant 0 : i32
    %c0_i32_1 = arith.constant 0 : i32
    return %c0_i32, %c0_i32_0 : i32, i32
  }
  func.func @transform_5(%arg0: i32) -> (i32, i32) {
    %c0_i32 = arith.constant 0 : i32
    %c0_i32_0 = arith.constant 0 : i32
    %c0_i32_1 = arith.constant 0 : i32
    return %c0_i32, %c0_i32_0 : i32, i32
  }
  func.func @transform_6(%arg0: i32) -> (i32, i32) {
    %c0_i32 = arith.constant 0 : i32
    %c0_i32_0 = arith.constant 0 : i32
    %c0_i32_1 = arith.constant 0 : i32
    return %c0_i32, %c0_i32_0 : i32, i32
  }
  func.func @transform_7(%arg0: i32) -> (i32, i32) {
    %c0_i32 = arith.constant 0 : i32
    %c0_i32_0 = arith.constant 0 : i32
    %c0_i32_1 = arith.constant 0 : i32
    return %c0_i32, %c0_i32_0 : i32, i32
  }
  func.func @transform_8(%arg0: i32) -> (i32, i32) {
    %c0_i32 = arith.constant 0 : i32
    %c0_i32_0 = arith.constant 0 : i32
    %c0_i32_1 = arith.constant 0 : i32
    return %c0_i32, %c0_i32_0 : i32, i32
  }
  func.func @transform_9(%arg0: i32) -> (i32, i32) {
    %c0_i32 = arith.constant 0 : i32
    %c0_i32_0 = arith.constant 0 : i32
    %c0_i32_1 = arith.constant 0 : i32
    return %c0_i32, %c0_i32_0 : i32, i32
  }
  func.func @transform_10(%arg0: i32) -> (i32, i32) {
    %c0_i32 = arith.constant 0 : i32
    %c0_i32_0 = arith.constant 0 : i32
    %c0_i32_1 = arith.constant 0 : i32
    return %c0_i32, %c0_i32_0 : i32, i32
  }
  func.func @transform_11(%arg0: i32) -> (i32, i32) {
    %c0_i32 = arith.constant 0 : i32
    %c0_i32_0 = arith.constant 0 : i32
    %c0_i32_1 = arith.constant 0 : i32
    return %c0_i32, %c0_i32_0 : i32, i32
  }
  func.func @transform_12(%arg0: i32) -> (i32, i32) {
    %c0_i32 = arith.constant 0 : i32
    %c0_i32_0 = arith.constant 0 : i32
    %c0_i32_1 = arith.constant 0 : i32
    return %c0_i32, %c0_i32_0 : i32, i32
  }
  func.func @transform_13(%arg0: i32) -> (i32, i32, i32) {
    %c0_i32 = arith.constant 0 : i32
    %c0_i32_0 = arith.constant 0 : i32
    %c0_i32_1 = arith.constant 0 : i32
    return %arg0, %c0_i32, %c0_i32_0 : i32, i32, i32
  }
}

</mosaic_0001>

<llo_original>
// kernel: tpu_custom_call.1
$region0: #{tpu_custom_call.1}
  #allocation0 [shape = 'u32[]', space=smem, size = 0x4, offset = 0x4, fixed_abs, tag = 'smem constant byte address 0x4 - core index']
  #allocation1 [shape = 'u32[144,128]{1,0:T(1,128)}', space=vmem, size = 0x12000, scoped, tag = 'internal scratch']
  #allocation2 [shape = 'bf16[64,64]{1,0:T(8,128)(2,1)}', space=vmem, size = 0x4000, scoped, tag = 'scratch operand']
  %s0 = inlined_call_operand.vmem [shape: bf16[4,16,64], index: 0, kind: input, shape index: {}]
  %s1 = inlined_call_operand.hbm [shape: bf16[17,64], index: 1, kind: input, shape index: {}]
  %s2 = inlined_call_operand.vmem [shape: f32[32,128], index: 2, kind: input, shape index: {}]
  %s3 = inlined_call_operand.vmem [shape: bf16[64,128], index: 3, kind: input, shape index: {}]
  %s4 = inlined_call_operand.vmem [shape: bf16[128,64], index: 4, kind: input, shape index: {}]
  %s5 = inlined_call_operand.hbm [shape: bf16[64,64], index: 5, kind: input, shape index: {}]
  %s6 = inlined_call_operand.vmem [shape: f32[1,64], index: 6, kind: input, shape index: {}]
  %s7 = inlined_call_operand.hbm [shape: bf16[64,64], index: 7, kind: input, shape index: {}]
  %s8 = inlined_call_operand.vmem [shape: f32[1,64], index: 8, kind: input, shape index: {}]
  %s9 = inlined_call_operand.hbm [shape: bf16[64,64], index: 9, kind: input, shape index: {}]
  %s10 = inlined_call_operand.vmem [shape: f32[1,64], index: 10, kind: input, shape index: {}]
  %s11 = inlined_call_operand.hbm [shape: bf16[64,128], index: 11, kind: input, shape index: {}]
  %s12 = inlined_call_operand.vmem [shape: f32[1,128], index: 12, kind: input, shape index: {}]
  %s13 = inlined_call_operand.hbm [shape: f32[2,2,128], index: 13, kind: output, shape index: {}]
  %s14 = sld [smem:[#allocation0]]
  $region105: #{tpu_custom_call.1} parent=0
    _
  %s16 = ssub.s32 1, %s14
  %s17 = scalar_select 0, %s16, %s14
  $region1: #{tpu_custom_call.1} parent=0
    #allocation3 [shape = 'u8[6144]{0}', space=vmem, size = 0x1800, scoped, tag = 'input window, operand 1, single buffered']
    #allocation4 [shape = 's32[2]{0}', space=sflag, size = 0x8, scoped, tag = 'scoped memory for tpu_custom_call.1']
    #allocation5 [shape = 's32[2]{0}', space=sflag, size = 0x8, scoped, tag = 'scoped memory for tpu_custom_call.1']
    #allocation6 [shape = 'u8[16384]{0}', space=vmem, size = 0x4000, scoped, tag = 'input window, operand 5, single buffered']
    #allocation7 [shape = 's32[1]{0}', space=sflag, size = 0x4, scoped, tag = 'scoped memory for tpu_custom_call.1']
    #allocation8 [shape = 'u8[16384]{0}', space=vmem, size = 0x4000, scoped, tag = 'input window, operand 7, single buffered']
    #allocation9 [shape = 'u8[16384]{0}', space=vmem, size = 0x4000, scoped, tag = 'input window, operand 9, single buffered']
    #allocation10 [shape = 's32[1]{0}', space=sflag, size = 0x4, scoped, tag = 'scoped memory for tpu_custom_call.1']
    #allocation11 [shape = 'u8[16384]{0}', space=vmem, size = 0x4000, scoped, tag = 'input window, operand 11, single buffered']
    #allocation12 [shape = 'u8[2048]{0}', space=vmem, size = 0x800, scoped, tag = 'output window, operand 0']
    %18 = vsyncpa [#allocation4], 0
    %19 = vsyncpa [#allocation7], 0
    %20 = vsyncpa [#allocation10], 0
    %21 = vsyncpa [#allocation5], 0
    %s22 = scalar_lea.sflag [#allocation5], 1
    %23 = vsyncpa %s22, 0
    loop: start=0, step=1, limit=4
    $region2: #{tpu_custom_call.1} parent=1 // loop_pre_header
      _
    $region3: #{tpu_custom_call.1} parent=1 // loop_header
      %s25 = sphi 0, %s29
      %p26 = scmp.ge.s32.totalorder %s25, 4
      %s35 = sphi 0, %s37
      %s38 = sphi 0, %s35
      %s39 = sphi 0, %s38
      %s55 = sphi 0, %s39
      %s59 = sphi 0, %s59
      %s61 = sphi 0, %s59
      %s62 = sphi 0, %s61
      %s76 = sphi 0, %s62
      %s80 = sphi 0, %s80
      %s82 = sphi 0, %s80
      %s83 = sphi 0, %s82
      %s97 = sphi 0, %s83
      %s101 = sphi 0, %s101
      %s103 = sphi 0, %s101
      %s104 = sphi 0, %s103
      %s118 = sphi 0, %s104
      %s122 = sphi 0, %s122
      %s124 = sphi 0, %s122
      %s125 = sphi 0, %s124
      %s139 = sphi 0, %s125
      %s143 = sphi 0, %s143
      %s145 = sphi 0, %s143
      %s146 = sphi 0, %s145
      %s160 = sphi 0, %s146
      %s164 = sphi 0, %s164
      %s166 = sphi 0, %s164
      %s167 = sphi 0, %s166
      %s181 = sphi 0, %s167
      %s185 = sphi 0, %s185
      %s187 = sphi 0, %s185
      %s188 = sphi 0, %s187
      %s202 = sphi 0, %s188
      %s206 = sphi 0, %s206
      %s208 = sphi 0, %s206
      %s209 = sphi 0, %s208
      %s223 = sphi 0, %s209
      %s227 = sphi 0, %s227
      %s229 = sphi 0, %s227
      %s230 = sphi 0, %s229
      %s244 = sphi 0, %s230
      %s248 = sphi 0, %s248
      %s250 = sphi 0, %s248
      %s251 = sphi 0, %s250
      %s265 = sphi 0, %s251
      %s269 = sphi 0, %s269
      %s271 = sphi 0, %s269
      %s272 = sphi 0, %s271
      %s286 = sphi 0, %s272
      %s290 = sphi 0, %s290
      %s292 = sphi 0, %s290
      %s293 = sphi 0, %s292
      %s307 = sphi 0, %s293
      %s313 = sphi 0, %s315
      %s316 = sphi 0, %s313
      %s317 = sphi 0, %s316
      %s333 = sphi 0, %s317
    $region4: #{tpu_custom_call.1} parent=1 // loop_header_branch
      %28 = sbr.rel (%p26) target = $region8
    $region5: #{tpu_custom_call.1} parent=1 // loop_body
      %s30 = ssub.s32 %s25, 1
      %s31 = ssub.s32 %s25, 2
      %s32 = sadd.s32 %s25, 1
      %s33 = ssub.s32 %s25, %s32
      %p34 = scmp.eq.s32.totalorder %s33, 0
      %s36 = sadd.s32 %s35, 1
      %s37 = scalar_select %p34, %s35, %s36
      %p40 = pneg %p34
      %p41 = scmp.eq.s32.totalorder %s25, 1
      %p42 = por %p40, %p41
      %p43 = scmp.ne.s32.totalorder %s35, %s38
      %p44 = scmp.eq.s32.totalorder %s25, 0
      %p45 = por %p43, %p44
      %p46 = scmp.ne.s32.totalorder %s35, %s38
      %p47 = scmp.eq.s32.totalorder %s30, 1
      %p48 = por %p46, %p47
      %p49 = scmp.ne.s32.totalorder %s38, %s39
      %p50 = scmp.eq.s32.totalorder %s30, 0
      %p51 = por %p49, %p50
      %p52 = scmp.ne.s32.totalorder %s38, %s39
      %p53 = scmp.eq.s32.totalorder %s31, 1
      %p54 = por %p52, %p53
      %p56 = scmp.ne.s32.totalorder %s39, %s55
      %p57 = scmp.eq.s32.totalorder %s31, 0
      %p58 = por %p56, %p57
      %s60 = sadd.s32 %s59, 1
      %p63 = scmp.eq.s32.totalorder %s25, 1
      %p64 = scmp.ne.s32.totalorder %s59, %s61
      %p65 = scmp.eq.s32.totalorder %s25, 0
      %p66 = por %p64, %p65
      %p67 = scmp.ne.s32.totalorder %s59, %s61
      %p68 = scmp.eq.s32.totalorder %s30, 1
      %p69 = por %p67, %p68
      %p70 = scmp.ne.s32.totalorder %s61, %s62
      %p71 = scmp.eq.s32.totalorder %s30, 0
      %p72 = por %p70, %p71
      %p73 = scmp.ne.s32.totalorder %s61, %s62
      %p74 = scmp.eq.s32.totalorder %s31, 1
      %p75 = por %p73, %p74
      %p77 = scmp.ne.s32.totalorder %s62, %s76
      %p78 = scmp.eq.s32.totalorder %s31, 0
      %p79 = por %p77, %p78
      %s81 = sadd.s32 %s80, 1
      %p84 = scmp.eq.s32.totalorder %s25, 1
      %p85 = scmp.ne.s32.totalorder %s80, %s82
      %p86 = scmp.eq.s32.totalorder %s25, 0
      %p87 = por %p85, %p86
      %p88 = scmp.ne.s32.totalorder %s80, %s82
      %p89 = scmp.eq.s32.totalorder %s30, 1
      %p90 = por %p88, %p89
      %p91 = scmp.ne.s32.totalorder %s82, %s83
      %p92 = scmp.eq.s32.totalorder %s30, 0
      %p93 = por %p91, %p92
      %p94 = scmp.ne.s32.totalorder %s82, %s83
      %p95 = scmp.eq.s32.totalorder %s31, 1
      %p96 = por %p94, %p95
      %p98 = scmp.ne.s32.totalorder %s83, %s97
      %p99 = scmp.eq.s32.totalorder %s31, 0
      %p100 = por %p98, %p99
      %s102 = sadd.s32 %s101, 1
      %p105 = scmp.eq.s32.totalorder %s25, 1
      %p106 = scmp.ne.s32.totalorder %s101, %s103
      %p107 = scmp.eq.s32.totalorder %s25, 0
      %p108 = por %p106, %p107
      %p109 = scmp.ne.s32.totalorder %s101, %s103
      %p110 = scmp.eq.s32.totalorder %s30, 1
      %p111 = por %p109, %p110
      %p112 = scmp.ne.s32.totalorder %s103, %s104
      %p113 = scmp.eq.s32.totalorder %s30, 0
      %p114 = por %p112, %p113
      %p115 = scmp.ne.s32.totalorder %s103, %s104
      %p116 = scmp.eq.s32.totalorder %s31, 1
      %p117 = por %p115, %p116
      %p119 = scmp.ne.s32.totalorder %s104, %s118
      %p120 = scmp.eq.s32.totalorder %s31, 0
      %p121 = por %p119, %p120
      %s123 = sadd.s32 %s122, 1
      %p126 = scmp.eq.s32.totalorder %s25, 1
      %p127 = scmp.ne.s32.totalorder %s122, %s124
      %p128 = scmp.eq.s32.totalorder %s25, 0
      %p129 = por %p127, %p128
      %p130 = scmp.ne.s32.totalorder %s122, %s124
      %p131 = scmp.eq.s32.totalorder %s30, 1
      %p132 = por %p130, %p131
      %p133 = scmp.ne.s32.totalorder %s124, %s125
      %p134 = scmp.eq.s32.totalorder %s30, 0
      %p135 = por %p133, %p134
      %p136 = scmp.ne.s32.totalorder %s124, %s125
      %p137 = scmp.eq.s32.totalorder %s31, 1
      %p138 = por %p136, %p137
      %p140 = scmp.ne.s32.totalorder %s125, %s139
      %p141 = scmp.eq.s32.totalorder %s31, 0
      %p142 = por %p140, %p141
      %s144 = sadd.s32 %s143, 1
      %p147 = scmp.eq.s32.totalorder %s25, 1
      %p148 = scmp.ne.s32.totalorder %s143, %s145
      %p149 = scmp.eq.s32.totalorder %s25, 0
      %p150 = por %p148, %p149
      %p151 = scmp.ne.s32.totalorder %s143, %s145
      %p152 = scmp.eq.s32.totalorder %s30, 1
      %p153 = por %p151, %p152
      %p154 = scmp.ne.s32.totalorder %s145, %s146
      %p155 = scmp.eq.s32.totalorder %s30, 0
      %p156 = por %p154, %p155
      %p157 = scmp.ne.s32.totalorder %s145, %s146
      %p158 = scmp.eq.s32.totalorder %s31, 1
      %p159 = por %p157, %p158
      %p161 = scmp.ne.s32.totalorder %s146, %s160
      %p162 = scmp.eq.s32.totalorder %s31, 0
      %p163 = por %p161, %p162
      %s165 = sadd.s32 %s164, 1
      %p168 = scmp.eq.s32.totalorder %s25, 1
      %p169 = scmp.ne.s32.totalorder %s164, %s166
      %p170 = scmp.eq.s32.totalorder %s25, 0
      %p171 = por %p169, %p170
      %p172 = scmp.ne.s32.totalorder %s164, %s166
      %p173 = scmp.eq.s32.totalorder %s30, 1
      %p174 = por %p172, %p173
      %p175 = scmp.ne.s32.totalorder %s166, %s167
      %p176 = scmp.eq.s32.totalorder %s30, 0
      %p177 = por %p175, %p176
      %p178 = scmp.ne.s32.totalorder %s166, %s167
      %p179 = scmp.eq.s32.totalorder %s31, 1
      %p180 = por %p178, %p179
      %p182 = scmp.ne.s32.totalorder %s167, %s181
      %p183 = scmp.eq.s32.totalorder %s31, 0
      %p184 = por %p182, %p183
      %s186 = sadd.s32 %s185, 1
      %p189 = scmp.eq.s32.totalorder %s25, 1
      %p190 = scmp.ne.s32.totalorder %s185, %s187
      %p191 = scmp.eq.s32.totalorder %s25, 0
      %p192 = por %p190, %p191
      %p193 = scmp.ne.s32.totalorder %s185, %s187
      %p194 = scmp.eq.s32.totalorder %s30, 1
      %p195 = por %p193, %p194
      %p196 = scmp.ne.s32.totalorder %s187, %s188
      %p197 = scmp.eq.s32.totalorder %s30, 0
      %p198 = por %p196, %p197
      %p199 = scmp.ne.s32.totalorder %s187, %s188
      %p200 = scmp.eq.s32.totalorder %s31, 1
      %p201 = por %p199, %p200
      %p203 = scmp.ne.s32.totalorder %s188, %s202
      %p204 = scmp.eq.s32.totalorder %s31, 0
      %p205 = por %p203, %p204
      %s207 = sadd.s32 %s206, 1
      %p210 = scmp.eq.s32.totalorder %s25, 1
      %p211 = scmp.ne.s32.totalorder %s206, %s208
      %p212 = scmp.eq.s32.totalorder %s25, 0
      %p213 = por %p211, %p212
      %p214 = scmp.ne.s32.totalorder %s206, %s208
      %p215 = scmp.eq.s32.totalorder %s30, 1
      %p216 = por %p214, %p215
      %p217 = scmp.ne.s32.totalorder %s208, %s209
      %p218 = scmp.eq.s32.totalorder %s30, 0
      %p219 = por %p217, %p218
      %p220 = scmp.ne.s32.totalorder %s208, %s209
      %p221 = scmp.eq.s32.totalorder %s31, 1
      %p222 = por %p220, %p221
      %p224 = scmp.ne.s32.totalorder %s209, %s223
      %p225 = scmp.eq.s32.totalorder %s31, 0
      %p226 = por %p224, %p225
      %s228 = sadd.s32 %s227, 1
      %p231 = scmp.eq.s32.totalorder %s25, 1
      %p232 = scmp.ne.s32.totalorder %s227, %s229
      %p233 = scmp.eq.s32.totalorder %s25, 0
      %p234 = por %p232, %p233
      %p235 = scmp.ne.s32.totalorder %s227, %s229
      %p236 = scmp.eq.s32.totalorder %s30, 1
      %p237 = por %p235, %p236
      %p238 = scmp.ne.s32.totalorder %s229, %s230
      %p239 = scmp.eq.s32.totalorder %s30, 0
      %p240 = por %p238, %p239
      %p241 = scmp.ne.s32.totalorder %s229, %s230
      %p242 = scmp.eq.s32.totalorder %s31, 1
      %p243 = por %p241, %p242
      %p245 = scmp.ne.s32.totalorder %s230, %s244
      %p246 = scmp.eq.s32.totalorder %s31, 0
      %p247 = por %p245, %p246
      %s249 = sadd.s32 %s248, 1
      %p252 = scmp.eq.s32.totalorder %s25, 1
      %p253 = scmp.ne.s32.totalorder %s248, %s250
      %p254 = scmp.eq.s32.totalorder %s25, 0
      %p255 = por %p253, %p254
      %p256 = scmp.ne.s32.totalorder %s248, %s250
      %p257 = scmp.eq.s32.totalorder %s30, 1
      %p258 = por %p256, %p257
      %p259 = scmp.ne.s32.totalorder %s250, %s251
      %p260 = scmp.eq.s32.totalorder %s30, 0
      %p261 = por %p259, %p260
      %p262 = scmp.ne.s32.totalorder %s250, %s251
      %p263 = scmp.eq.s32.totalorder %s31, 1
      %p264 = por %p262, %p263
      %p266 = scmp.ne.s32.totalorder %s251, %s265
      %p267 = scmp.eq.s32.totalorder %s31, 0
      %p268 = por %p266, %p267
      %s270 = sadd.s32 %s269, 1
      %p273 = scmp.eq.s32.totalorder %s25, 1
      %p274 = scmp.ne.s32.totalorder %s269, %s271
      %p275 = scmp.eq.s32.totalorder %s25, 0
      %p276 = por %p274, %p275
      %p277 = scmp.ne.s32.totalorder %s269, %s271
      %p278 = scmp.eq.s32.totalorder %s30, 1
      %p279 = por %p277, %p278
      %p280 = scmp.ne.s32.totalorder %s271, %s272
      %p281 = scmp.eq.s32.totalorder %s30, 0
      %p282 = por %p280, %p281
      %p283 = scmp.ne.s32.totalorder %s271, %s272
      %p284 = scmp.eq.s32.totalorder %s31, 1
      %p285 = por %p283, %p284
      %p287 = scmp.ne.s32.totalorder %s272, %s286
      %p288 = scmp.eq.s32.totalorder %s31, 0
      %p289 = por %p287, %p288
      %s291 = sadd.s32 %s290, 1
      %p294 = scmp.eq.s32.totalorder %s25, 1
      %p295 = scmp.ne.s32.totalorder %s290, %s292
      %p296 = scmp.eq.s32.totalorder %s25, 0
      %p297 = por %p295, %p296
      %p298 = scmp.ne.s32.totalorder %s290, %s292
      %p299 = scmp.eq.s32.totalorder %s30, 1
      %p300 = por %p298, %p299
      %p301 = scmp.ne.s32.totalorder %s292, %s293
      %p302 = scmp.eq.s32.totalorder %s30, 0
      %p303 = por %p301, %p302
      %p304 = scmp.ne.s32.totalorder %s292, %s293
      %p305 = scmp.eq.s32.totalorder %s31, 1
      %p306 = por %p304, %p305
      %p308 = scmp.ne.s32.totalorder %s293, %s307
      %p309 = scmp.eq.s32.totalorder %s31, 0
      %p310 = por %p308, %p309
      %s311 = ssub.s32 %s25, %s32
      %p312 = scmp.eq.s32.totalorder %s311, 0
      %s314 = sadd.s32 %s313, 1
      %s315 = scalar_select %p312, %s313, %s314
      %p318 = pneg %p312
      %p319 = scmp.eq.s32.totalorder %s25, 1
      %p320 = por %p318, %p319
      %p321 = scmp.ne.s32.totalorder %s313, %s316
      %p322 = scmp.eq.s32.totalorder %s25, 0
      %p323 = por %p321, %p322
      %p324 = scmp.ne.s32.totalorder %s313, %s316
      %p325 = scmp.eq.s32.totalorder %s30, 1
      %p326 = por %p324, %p325
      %p327 = scmp.ne.s32.totalorder %s316, %s317
      %p328 = scmp.eq.s32.totalorder %s30, 0
      %p329 = por %p327, %p328
      %p330 = scmp.ne.s32.totalorder %s316, %s317
      %p331 = scmp.eq.s32.totalorder %s31, 1
      %p332 = por %p330, %p331
      %p334 = scmp.ne.s32.totalorder %s317, %s333
      %p335 = scmp.eq.s32.totalorder %s31, 0
      %p336 = por %p334, %p335
      %p337 = scmp.le.s32.totalorder 1, %s25
      %p338 = scmp.lt.s32.totalorder %s25, 3
      %p339 = pnand %p337, %p338
      %p340 = pneg %p339
      // Predicated region
      $region9: #{tpu_custom_call.1} parent=5 // pred_check
        _
      $region10: #{tpu_custom_call.1} parent=5 // pred_check_branch
        %342 = sbr.rel (%p339) target = $region12
      $region11: #{tpu_custom_call.1} parent=5 // pred_region
        %s343 = ssub.s32 %s25, 1
        // Predicated region
        $region13: #{tpu_custom_call.1} parent=11 // pred_check
          %p344 = pneg %p72
        $region14: #{tpu_custom_call.1} parent=11 // pred_check_branch
          %346 = sbr.rel (%p344) target = $region16
        $region15: #{tpu_custom_call.1} parent=11 // pred_region
          %s348 = ssub.s32 192, 192
          %349 = vsyncadd [#allocation4], %s348
          %s350 = sshll.u32 [#allocation3], 4
          %s351 = int_to_ptr.vmem [resolvable:$true] %s350
          %356 = dma.hbm_to_vmem [thread:$0]  %s1, 192, %s351, [#allocation4], 64, 64, 4
        $region16: #{tpu_custom_call.1} parent=11 // pred_fallthru
          _
        // Predicated region
        $region17: #{tpu_custom_call.1} parent=11 // pred_check
          %p357 = pneg %p93
        $region18: #{tpu_custom_call.1} parent=11 // pred_check_branch
          %359 = sbr.rel (%p357) target = $region20
        $region19: #{tpu_custom_call.1} parent=11 // pred_region
          _
        $region20: #{tpu_custom_call.1} parent=11 // pred_fallthru
          _
        // Predicated region
        $region21: #{tpu_custom_call.1} parent=11 // pred_check
          %p360 = pneg %p114
        $region22: #{tpu_custom_call.1} parent=11 // pred_check_branch
          %362 = sbr.rel (%p360) target = $region24
        $region23: #{tpu_custom_call.1} parent=11 // pred_region
          _
        $region24: #{tpu_custom_call.1} parent=11 // pred_fallthru
          _
        // Predicated region
        $region25: #{tpu_custom_call.1} parent=11 // pred_check
          %p363 = pneg %p135
        $region26: #{tpu_custom_call.1} parent=11 // pred_check_branch
          %365 = sbr.rel (%p363) target = $region28
        $region27: #{tpu_custom_call.1} parent=11 // pred_region
          _
        $region28: #{tpu_custom_call.1} parent=11 // pred_fallthru
          _
        // Predicated region
        $region29: #{tpu_custom_call.1} parent=11 // pred_check
          %p366 = pneg %p156
        $region30: #{tpu_custom_call.1} parent=11 // pred_check_branch
          %368 = sbr.rel (%p366) target = $region32
        $region31: #{tpu_custom_call.1} parent=11 // pred_region
          %s370 = ssub.s32 512, 512
          %371 = vsyncadd [#allocation7], %s370
          %s372 = sshll.u32 [#allocation6], 4
          %s373 = int_to_ptr.vmem [resolvable:$true] %s372
          %378 = dma.hbm_to_vmem [thread:$0]  %s5, 512, %s373, [#allocation7], 64, 64, 4
        $region32: #{tpu_custom_call.1} parent=11 // pred_fallthru
          _
        // Predicated region
        $region33: #{tpu_custom_call.1} parent=11 // pred_check
          %p379 = pneg %p177
        $region34: #{tpu_custom_call.1} parent=11 // pred_check_branch
          %381 = sbr.rel (%p379) target = $region36
        $region35: #{tpu_custom_call.1} parent=11 // pred_region
          _
        $region36: #{tpu_custom_call.1} parent=11 // pred_fallthru
          _
        // Predicated region
        $region37: #{tpu_custom_call.1} parent=11 // pred_check
          %p382 = pneg %p198
        $region38: #{tpu_custom_call.1} parent=11 // pred_check_branch
          %384 = sbr.rel (%p382) target = $region40
        $region39: #{tpu_custom_call.1} parent=11 // pred_region
          %s386 = ssub.s32 512, 512
          %387 = vsyncadd [#allocation7], %s386
          %s388 = sshll.u32 [#allocation8], 4
          %s389 = int_to_ptr.vmem [resolvable:$true] %s388
          %394 = dma.hbm_to_vmem [thread:$0]  %s7, 512, %s389, [#allocation7], 64, 64, 4
        $region40: #{tpu_custom_call.1} parent=11 // pred_fallthru
          _
        // Predicated region
        $region41: #{tpu_custom_call.1} parent=11 // pred_check
          %p395 = pneg %p219
        $region42: #{tpu_custom_call.1} parent=11 // pred_check_branch
          %397 = sbr.rel (%p395) target = $region44
        $region43: #{tpu_custom_call.1} parent=11 // pred_region
          _
        $region44: #{tpu_custom_call.1} parent=11 // pred_fallthru
          _
        // Predicated region
        $region45: #{tpu_custom_call.1} parent=11 // pred_check
          %p398 = pneg %p240
        $region46: #{tpu_custom_call.1} parent=11 // pred_check_branch
          %400 = sbr.rel (%p398) target = $region48
        $region47: #{tpu_custom_call.1} parent=11 // pred_region
          %s402 = ssub.s32 512, 512
          %403 = vsyncadd [#allocation10], %s402
          %s404 = sshll.u32 [#allocation9], 4
          %s405 = int_to_ptr.vmem [resolvable:$true] %s404
          %410 = dma.hbm_to_vmem [thread:$0]  %s9, 512, %s405, [#allocation10], 64, 64, 4
        $region48: #{tpu_custom_call.1} parent=11 // pred_fallthru
          _
        // Predicated region
        $region49: #{tpu_custom_call.1} parent=11 // pred_check
          %p411 = pneg %p261
        $region50: #{tpu_custom_call.1} parent=11 // pred_check_branch
          %413 = sbr.rel (%p411) target = $region52
        $region51: #{tpu_custom_call.1} parent=11 // pred_region
          _
        $region52: #{tpu_custom_call.1} parent=11 // pred_fallthru
          _
        // Predicated region
        $region53: #{tpu_custom_call.1} parent=11 // pred_check
          %p414 = pneg %p282
        $region54: #{tpu_custom_call.1} parent=11 // pred_check_branch
          %416 = sbr.rel (%p414) target = $region56
        $region55: #{tpu_custom_call.1} parent=11 // pred_region
          %s418 = ssub.s32 512, 512
          %419 = vsyncadd [#allocation10], %s418
          %s420 = sshll.u32 [#allocation11], 4
          %s421 = int_to_ptr.vmem [resolvable:$true] %s420
          %426 = dma.hbm_to_vmem [thread:$0]  %s11, 512, %s421, [#allocation10], 64, 64, 4
        $region56: #{tpu_custom_call.1} parent=11 // pred_fallthru
          _
        // Predicated region
        $region57: #{tpu_custom_call.1} parent=11 // pred_check
          %p427 = pneg %p303
        $region58: #{tpu_custom_call.1} parent=11 // pred_check_branch
          %429 = sbr.rel (%p427) target = $region60
        $region59: #{tpu_custom_call.1} parent=11 // pred_region
          _
        $region60: #{tpu_custom_call.1} parent=11 // pred_fallthru
          _
      $region12: #{tpu_custom_call.1} parent=5 // pred_fallthru
        _
      %p430 = scmp.lt.s32.totalorder %s25, 2
      // Predicated region
      $region61: #{tpu_custom_call.1} parent=5 // pred_check
        %p431 = pneg %p430
      $region62: #{tpu_custom_call.1} parent=5 // pred_check_branch
        %433 = sbr.rel (%p431) target = $region64
      $region63: #{tpu_custom_call.1} parent=5 // pred_region
        // Predicated region
        $region65: #{tpu_custom_call.1} parent=63 // pred_check
          %p434 = pneg %p45
        $region66: #{tpu_custom_call.1} parent=63 // pred_check_branch
          %436 = sbr.rel (%p434) target = $region68
        $region67: #{tpu_custom_call.1} parent=63 // pred_region
          %s437 = smul.u32 2, %s25
          %p438 = scmp.lt.s32.totalorder %s437, 3
          %s439 = scalar_select %p438, %s437, 3
          %s440 = smul.addr %s439, 2
          %s441 = smul.addr %s440, 4
          %s442 = scalar_lea.vmem %s0, %s441
          %s443 = smul.u32 2, %s25
        $region68: #{tpu_custom_call.1} parent=63 // pred_fallthru
          _
      $region64: #{tpu_custom_call.1} parent=5 // pred_fallthru
        _
      %p444 = scmp.le.s32.totalorder 1, %s25
      %p445 = scmp.lt.s32.totalorder %s25, 3
      %p446 = pnand %p444, %p445
      %p447 = pneg %p446
      // Predicated region
      $region69: #{tpu_custom_call.1} parent=5 // pred_check
        _
      $region70: #{tpu_custom_call.1} parent=5 // pred_check_branch
        %449 = sbr.rel (%p446) target = $region72
      $region71: #{tpu_custom_call.1} parent=5 // pred_region
        %s450 = ssub.s32 %s25, 1
        // Predicated region
        $region73: #{tpu_custom_call.1} parent=71 // pred_check
          %p451 = pneg %p72
        $region74: #{tpu_custom_call.1} parent=71 // pred_check_branch
          %453 = sbr.rel (%p451) target = $region76
        $region75: #{tpu_custom_call.1} parent=71 // pred_region
          %454 = dma.done [#allocation4], 192
        $region76: #{tpu_custom_call.1} parent=71 // pred_fallthru
          _
        // Predicated region
        $region77: #{tpu_custom_call.1} parent=71 // pred_check
          %p455 = pneg %p156
        $region78: #{tpu_custom_call.1} parent=71 // pred_check_branch
          %457 = sbr.rel (%p455) target = $region80
        $region79: #{tpu_custom_call.1} parent=71 // pred_region
          %458 = dma.done [#allocation7], 512
        $region80: #{tpu_custom_call.1} parent=71 // pred_fallthru
          _
        // Predicated region
        $region81: #{tpu_custom_call.1} parent=71 // pred_check
          %p459 = pneg %p198
        $region82: #{tpu_custom_call.1} parent=71 // pred_check_branch
          %461 = sbr.rel (%p459) target = $region84
        $region83: #{tpu_custom_call.1} parent=71 // pred_region
          %462 = dma.done [#allocation7], 512
        $region84: #{tpu_custom_call.1} parent=71 // pred_fallthru
          _
        // Predicated region
        $region85: #{tpu_custom_call.1} parent=71 // pred_check
          %p463 = pneg %p240
        $region86: #{tpu_custom_call.1} parent=71 // pred_check_branch
          %465 = sbr.rel (%p463) target = $region88
        $region87: #{tpu_custom_call.1} parent=71 // pred_region
          %466 = dma.done [#allocation10], 512
        $region88: #{tpu_custom_call.1} parent=71 // pred_fallthru
          _
        // Predicated region
        $region89: #{tpu_custom_call.1} parent=71 // pred_check
          %p467 = pneg %p282
        $region90: #{tpu_custom_call.1} parent=71 // pred_check_branch
          %469 = sbr.rel (%p467) target = $region92
        $region91: #{tpu_custom_call.1} parent=71 // pred_region
          %470 = dma.done [#allocation10], 512
        $region92: #{tpu_custom_call.1} parent=71 // pred_fallthru
          _
        %s471 = smul.u32 2, %s30
        %p472 = scmp.lt.s32.totalorder %s471, 3
        %s473 = scalar_select %p472, %s471, 3
        %s474 = smul.addr %s473, 2
        %s475 = smul.addr %s474, 4
        %s476 = scalar_lea.vmem %s0, %s475
        %p477 = pneg %p51
        %p478 = pneg %p48
        %p479 = pneg %p72
        %p480 = pneg %p69
        %p481 = pneg %p93
        %p482 = pneg %p90
        %p483 = pneg %p114
        %p484 = pneg %p111
        %p485 = pneg %p135
        %p486 = pneg %p132
        %p487 = pneg %p156
        %p488 = pneg %p153
        %p489 = pneg %p177
        %p490 = pneg %p174
        %p491 = pneg %p198
        %p492 = pneg %p195
        %p493 = pneg %p219
        %p494 = pneg %p216
        %p495 = pneg %p240
        %p496 = pneg %p237
        %p497 = pneg %p261
        %p498 = pneg %p258
        %p499 = pneg %p282
        %p500 = pneg %p279
        %p501 = pneg %p303
        %p502 = pneg %p300
        %p503 = pneg %p329
        %p504 = pneg %p326
        %s505 = sand.u32 %s316, 1
        %s506 = scalar_lea.sflag [#allocation5], %s505
        %s507 = sand.u32 %s316, 1
        %s508 = smul.addr %s507, 2
        %s509 = scalar_lea.vmem [#allocation12], %s508
        %s510 = smul.u32 2, %s30
        %p511 = scmp.lt.s32.totalorder %s510, 3
        %s512 = scalar_select %p511, %s510, 3
        %s513 = smul.addr %s512, 2
        %s514 = smul.addr %s513, 4
        %s515 = scalar_lea.vmem %s0, %s514
        %s516 = smul.u32 2, %s30
        %v518 = vld [vmem:[%s515] sm:$0xf]
        %v519 = vld [vmem:[%s515 + $0x4] sm:$0xf]
        %v520 = vld [vmem:[%s515 + $0x8] sm:$0xf]
        %v521 = vld [vmem:[%s515 + $0xc] sm:$0xf]
        %v522 = vunpack.c.l.bf16 %v518
        %v523 = vunpack.c.l.bf16 %v519
        %v524 = vunpack.c.l.bf16 %v520
        %v525 = vunpack.c.l.bf16 %v521
        %v526 = vld [vmem:[#allocation3] sm:$0xf]
        %v527 = vld [vmem:[#allocation3 + $0x4] sm:$0xf]
        %v528 = vld [vmem:[#allocation3 + $0x8] sm:$0x1]
        %v529 = vunpack.c.l.bf16 %v526
        %v530 = vunpack.c.l.bf16 %v527
        %v531 = vunpack.c.l.bf16 %v528
        %vm532 = vcmask 523264
        %v533 = vsel %vm532, %v522, 0.0
        %v534 = vsel %vm532, %v523, 0.0
        %v535 = vadd.f32 %v533, %v534
        %v536 = vrot.slane %v535, 4
        %v537 = vadd.f32 %v535, %v536
        %v538 = vrot.slane %v537, 2
        %v539 = vadd.f32 %v537, %v538
        %v540 = vrot.slane %v539, 1
        %v541 = vadd.f32 %v539, %v540
        %v542 = vsel %vm532, %v524, 0.0
        %v543 = vsel %vm532, %v525, 0.0
        %v544 = vadd.f32 %v542, %v543
        %v545 = vrot.slane %v544, 4
        %v546 = vadd.f32 %v544, %v545
        %v547 = vrot.slane %v546, 2
        %v548 = vadd.f32 %v546, %v547
        %v549 = vrot.slane %v548, 1
        %v550 = vadd.f32 %v548, %v549
        %v551 = vrcp.pop 16.0
        %v552 = vmul.f32 %v541, %v551
        %v553 = vmul.f32 %v550, %v551
        %v554 = vlaneseq
        %v555 = vshrl.u32 %v554, 7
        %v556 = vsub.s32 0, %v555
        %v557 = vrot.slane %v529, %v556
        %v558 = vadd.f32 %v552, %v557
        %v559 = vadd.f32 %v553, %v557
        %v560 = vpack.c.bf16 %v558, %v558
        %v561 = vpack.c.bf16 %v559, %v559
        %vm565 = vcmask 1046528
        %v566 = vrot.slane %v529, 1
        %v567 = vrot.slane %v530, 1
        %v568 = vsel %vm565, %v566, %v567
        %v569 = vrot.slane %v531, 1
        %v570 = vsel %vm565, %v567, %v569
        %v573 = vadd.f32 %v522, %v568
        %v574 = vadd.f32 %v523, %v570
        %v575 = vadd.f32 %v524, %v568
        %v576 = vadd.f32 %v525, %v570
        %v577 = vpack.c.bf16 %v574, %v573
        %v578 = vpack.c.bf16 %v576, %v575
        %v580 = vunpack.c.l.b16 %v577
        %v581 = vunpack.c.h.b16 %v577
        %v582 = vpack.c.b16 %v580, %v580
        %v583 = vpack.c.b16 %v581, %v581
        %vm586 = vcmask 519168
        %587 = vst.msk [vmem:[#allocation2] sm:$0xf] %vm586, %v582
        %588 = vst.msk [vmem:[#allocation2 + $0x4] sm:$0xf] %vm586, %v583
        %vm589 = vcmask 516096
        %vm590 = vsmask.f32 256
        %vm591 = vmand %vm589, %vm590
        %v592 = vld [vmem:[#allocation2 + $0x8] sm:$0x1]
        %v593 = vsel %vm591, %v560, %v592
        %594 = vst [vmem:[#allocation2 + $0x8] sm:$0x1] %v593
        %vm595 = vcmask 519168
        %vm596 = vsmask.f32 7938
        %vm597 = vmand %vm595, %vm596
        %v598 = vld [vmem:[#allocation2 + $0x8] sm:$0xf]
        %v599 = vsel %vm597, 0, %v598
        %600 = vst [vmem:[#allocation2 + $0x8] sm:$0xf] %v599
        %601 = vst.msk [vmem:[#allocation2 + $0xc] sm:$0xf] %vm586, 0
        %v603 = vunpack.c.l.b16 %v578
        %v604 = vunpack.c.h.b16 %v578
        %v605 = vpack.c.b16 %v603, %v603
        %v606 = vpack.c.b16 %v604, %v604
        %609 = vst.msk [vmem:[#allocation2 + $0x10] sm:$0xf] %vm586, %v605
        %610 = vst.msk [vmem:[#allocation2 + $0x14] sm:$0xf] %vm586, %v606
        %v611 = vld [vmem:[#allocation2 + $0x18] sm:$0x1]
        %v612 = vsel %vm591, %v561, %v611
        %613 = vst [vmem:[#allocation2 + $0x18] sm:$0x1] %v612
        %v614 = vld [vmem:[#allocation2 + $0x18] sm:$0xf]
        %v615 = vsel %vm597, 0, %v614
        %616 = vst [vmem:[#allocation2 + $0x18] sm:$0xf] %v615
        %617 = vst.msk [vmem:[#allocation2 + $0x1c] sm:$0xf] %vm586, 0
        %v618 = vld [vmem:[#allocation2] sm:$0xf]
        %v619 = vld [vmem:[#allocation2 + $0x4] sm:$0xf]
        %v620 = vld [vmem:[#allocation2 + $0x8] sm:$0xf]
        %v621 = vld [vmem:[#allocation2 + $0xc] sm:$0xf]
        %v622 = vld [vmem:[#allocation2 + $0x10] sm:$0xf]
        %v623 = vld [vmem:[#allocation2 + $0x14] sm:$0xf]
        %v624 = vld [vmem:[#allocation2 + $0x18] sm:$0xf]
        %v625 = vld [vmem:[#allocation2 + $0x1c] sm:$0xf]
        %v626 = vld [vmem:[#allocation8] sm:$0xf]
        %v627 = vld [vmem:[#allocation8 + $0x4] sm:$0xf]
        %v628 = vld [vmem:[#allocation8 + $0x8] sm:$0xf]
        %v629 = vld [vmem:[#allocation8 + $0xc] sm:$0xf]
        %v630 = vld [vmem:[#allocation8 + $0x10] sm:$0xf]
        %v631 = vld [vmem:[#allocation8 + $0x14] sm:$0xf]
        %v632 = vld [vmem:[#allocation8 + $0x18] sm:$0xf]
        %v633 = vld [vmem:[#allocation8 + $0x1c] sm:$0xf]
        %v634 = vld [vmem:[%s8] sm:$0x1]
        %v636 = vlaneseq
        %v637 = vshrl.u32 %v636, 7
        %v638 = vsub.s32 0, %v637
        %v639 = vrot.slane %v634, %v638
        %v649 = vunpack.c.l.b16 %v618
        %v650 = vunpack.c.l.b16 %v619
        %v651 = vunpack.c.l.b16 %v620
        %v652 = vunpack.c.l.b16 %v621
        %v653 = vunpack.c.l.b16 %v622
        %v654 = vunpack.c.l.b16 %v623
        %v655 = vunpack.c.l.b16 %v624
        %v656 = vunpack.c.l.b16 %v625
        %v657 = vpack.c.b16 %v650, %v649
        %v658 = vpack.c.b16 %v652, %v651
        %v659 = vpack.c.b16 %v654, %v653
        %v660 = vpack.c.b16 %v656, %v655
        %v669 = vunpack.c.l.b16 %v626
        %v670 = vunpack.c.l.b16 %v627
        %v671 = vunpack.c.l.b16 %v628
        %v672 = vunpack.c.l.b16 %v629
        %v673 = vunpack.c.l.b16 %v630
        %v674 = vunpack.c.l.b16 %v631
        %v675 = vunpack.c.l.b16 %v632
        %v676 = vunpack.c.l.b16 %v633
        %v677 = vpack.c.b16 %v670, %v669
        %v678 = vpack.c.b16 %v672, %v671
        %v679 = vpack.c.b16 %v674, %v673
        %v680 = vpack.c.b16 %v676, %v675
        %v686 = vsel %vm532, %v657, 0
        %v689 = vsel %vm532, %v658, 0
        %v692 = vsel %vm532, %v659, 0
        %v695 = vsel %vm532, %v660, 0
        %697 = vmatprep.subr.bf16.mxu0 0
        %698 = vmatpush1.bf16.msra.mxu0 0
        %699 = vmatprep.subr.bf16.mxu0 0
        %700 = vmatpush1.bf16.msra.mxu0 0
        %701 = vmatprep.subr.bf16.mxu0 0
        %702 = vmatpush1.bf16.msra.mxu0 0
        %703 = vmatprep.subr.bf16.mxu0 0
        %704 = vmatpush1.bf16.msra.mxu0 0
        %705 = vmatprep.subr.bf16.mxu0 0
        %706 = vmatpush1.bf16.msra.mxu0 %v680
        %707 = vmatprep.subr.bf16.mxu0 0
        %708 = vmatpush1.bf16.msra.mxu0 %v679
        %709 = vmatprep.subr.bf16.mxu0 0
        %710 = vmatpush1.bf16.msra.mxu0 %v678
        %711 = vmatprep.subr.bf16.mxu0 0
        %712 = vmatpush1.bf16.msra.mxu0 %v677
        %713 = vmatprep.subr.bf16.mxu0 0
        %714 = vmatpush2.bf16.msra.mxu0 0
        %715 = vmatprep.subr.bf16.mxu0 0
        %716 = vmatpush2.bf16.msra.mxu0 0
        %717 = vmatprep.subr.bf16.mxu0 0
        %718 = vmatpush2.bf16.msra.mxu0 0
        %719 = vmatprep.subr.bf16.mxu0 0
        %720 = vmatpush2.bf16.msra.mxu0 0
        %721 = vmatprep.subr.bf16.mxu0 0
        %722 = vmatpush2.bf16.msra.mxu0 0
        %723 = vmatprep.subr.bf16.mxu0 0
        %724 = vmatpush2.bf16.msra.mxu0 0
        %725 = vmatprep.subr.bf16.mxu0 0
        %726 = vmatpush2.bf16.msra.mxu0 0
        %727 = vmatprep.subr.bf16.mxu0 0
        %728 = vmatpush2.bf16.msra.mxu0 0
        %729 = vmatprep.mubr.bf16.mxu0 0
        %730 = vmatmul.mubr.bf16.gmra.mxu0 %v686
        %v731 = vpop.f32.mrf.mxu0
        %v732 = vadd.f32 %v639, %v731
        %v733 = vpop.f32.mrf.mxu0
        %v734 = vpop.f32.mrf.mxu0
        %v735 = vadd.f32 %v639, %v734
        %v736 = vpop.f32.mrf.mxu0
        %737 = vmatprep.mubr.bf16.mxu0 0
        %738 = vmatmul.mubr.bf16.gmra.mxu0 %v689
        %v739 = vpop.f32.mrf.mxu0
        %v740 = vadd.f32 %v639, %v739
        %v741 = vpop.f32.mrf.mxu0
        %v742 = vpop.f32.mrf.mxu0
        %v743 = vadd.f32 %v639, %v742
        %v744 = vpop.f32.mrf.mxu0
        %745 = vmatprep.mubr.bf16.mxu0 0
        %746 = vmatmul.mubr.bf16.gmra.mxu0 %v692
        %v747 = vpop.f32.mrf.mxu0
        %v748 = vadd.f32 %v639, %v747
        %v749 = vpop.f32.mrf.mxu0
        %v750 = vpop.f32.mrf.mxu0
        %v751 = vadd.f32 %v639, %v750
        %v752 = vpop.f32.mrf.mxu0
        %753 = vmatprep.mubr.bf16.mxu0 0
        %754 = vmatmul.mubr.bf16.gmra.mxu0 %v695
        %v755 = vpop.f32.mrf.mxu0
        %v756 = vadd.f32 %v639, %v755
        %v757 = vpop.f32.mrf.mxu0
        %v758 = vpop.f32.mrf.mxu0
        %v759 = vadd.f32 %v639, %v758
        %v760 = vpop.f32.mrf.mxu0
        %761 = vdwg.mxu0
        %v762 = vld [vmem:[#allocation9] sm:$0xf]
        %v763 = vld [vmem:[#allocation9 + $0x4] sm:$0xf]
        %v764 = vld [vmem:[#allocation9 + $0x8] sm:$0xf]
        %v765 = vld [vmem:[#allocation9 + $0xc] sm:$0xf]
        %v766 = vld [vmem:[#allocation9 + $0x10] sm:$0xf]
        %v767 = vld [vmem:[#allocation9 + $0x14] sm:$0xf]
        %v768 = vld [vmem:[#allocation9 + $0x18] sm:$0xf]
        %v769 = vld [vmem:[#allocation9 + $0x1c] sm:$0xf]
        %v770 = vld [vmem:[%s10] sm:$0x1]
        %v772 = vlaneseq
        %v773 = vshrl.u32 %v772, 7
        %v774 = vsub.s32 0, %v773
        %v775 = vrot.slane %v770, %v774
        %v785 = vunpack.c.l.b16 %v762
        %v786 = vunpack.c.l.b16 %v763
        %v787 = vunpack.c.l.b16 %v764
        %v788 = vunpack.c.l.b16 %v765
        %v789 = vunpack.c.l.b16 %v766
        %v790 = vunpack.c.l.b16 %v767
        %v791 = vunpack.c.l.b16 %v768
        %v792 = vunpack.c.l.b16 %v769
        %v793 = vpack.c.b16 %v786, %v785
        %v794 = vpack.c.b16 %v788, %v787
        %v795 = vpack.c.b16 %v790, %v789
        %v796 = vpack.c.b16 %v792, %v791
        %801 = vmatprep.subr.bf16.mxu0 0
        %802 = vmatpush1.bf16.msra.mxu0 0
        %803 = vmatprep.subr.bf16.mxu0 0
        %804 = vmatpush1.bf16.msra.mxu0 0
        %805 = vmatprep.subr.bf16.mxu0 0
        %806 = vmatpush1.bf16.msra.mxu0 0
        %807 = vmatprep.subr.bf16.mxu0 0
        %808 = vmatpush1.bf16.msra.mxu0 0
        %809 = vmatprep.subr.bf16.mxu0 0
        %810 = vmatpush1.bf16.msra.mxu0 %v796
        %811 = vmatprep.subr.bf16.mxu0 0
        %812 = vmatpush1.bf16.msra.mxu0 %v795
        %813 = vmatprep.subr.bf16.mxu0 0
        %814 = vmatpush1.bf16.msra.mxu0 %v794
        %815 = vmatprep.subr.bf16.mxu0 0
        %816 = vmatpush1.bf16.msra.mxu0 %v793
        %817 = vmatprep.subr.bf16.mxu0 0
        %818 = vmatpush2.bf16.msra.mxu0 0
        %819 = vmatprep.subr.bf16.mxu0 0
        %820 = vmatpush2.bf16.msra.mxu0 0
        %821 = vmatprep.subr.bf16.mxu0 0
        %822 = vmatpush2.bf16.msra.mxu0 0
        %823 = vmatprep.subr.bf16.mxu0 0
        %824 = vmatpush2.bf16.msra.mxu0 0
        %825 = vmatprep.subr.bf16.mxu0 0
        %826 = vmatpush2.bf16.msra.mxu0 0
        %827 = vmatprep.subr.bf16.mxu0 0
        %828 = vmatpush2.bf16.msra.mxu0 0
        %829 = vmatprep.subr.bf16.mxu0 0
        %830 = vmatpush2.bf16.msra.mxu0 0
        %831 = vmatprep.subr.bf16.mxu0 0
        %832 = vmatpush2.bf16.msra.mxu0 0
        %833 = vmatprep.mubr.bf16.mxu0 0
        %834 = vmatmul.mubr.bf16.gmra.mxu0 %v686
        %v835 = vpop.f32.mrf.mxu0
        %v836 = vadd.f32 %v775, %v835
        %v837 = vpop.f32.mrf.mxu0
        %v838 = vpop.f32.mrf.mxu0
        %v839 = vadd.f32 %v775, %v838
        %v840 = vpop.f32.mrf.mxu0
        %841 = vmatprep.mubr.bf16.mxu0 0
        %842 = vmatmul.mubr.bf16.gmra.mxu0 %v689
        %v843 = vpop.f32.mrf.mxu0
        %v844 = vadd.f32 %v775, %v843
        %v845 = vpop.f32.mrf.mxu0
        %v846 = vpop.f32.mrf.mxu0
        %v847 = vadd.f32 %v775, %v846
        %v848 = vpop.f32.mrf.mxu0
        %849 = vmatprep.mubr.bf16.mxu0 0
        %850 = vmatmul.mubr.bf16.gmra.mxu0 %v692
        %v851 = vpop.f32.mrf.mxu0
        %v852 = vadd.f32 %v775, %v851
        %v853 = vpop.f32.mrf.mxu0
        %v854 = vpop.f32.mrf.mxu0
        %v855 = vadd.f32 %v775, %v854
        %v856 = vpop.f32.mrf.mxu0
        %857 = vmatprep.mubr.bf16.mxu0 0
        %858 = vmatmul.mubr.bf16.gmra.mxu0 %v695
        %v859 = vpop.f32.mrf.mxu0
        %v860 = vadd.f32 %v775, %v859
        %v861 = vpop.f32.mrf.mxu0
        %v862 = vpop.f32.mrf.mxu0
        %v863 = vadd.f32 %v775, %v862
        %v864 = vpop.f32.mrf.mxu0
        %865 = vdwg.mxu0
        %v866 = vld [vmem:[#allocation6] sm:$0xf]
        %v867 = vld [vmem:[#allocation6 + $0x4] sm:$0xf]
        %v868 = vld [vmem:[#allocation6 + $0x8] sm:$0xf]
        %v869 = vld [vmem:[#allocation6 + $0xc] sm:$0xf]
        %v870 = vld [vmem:[#allocation6 + $0x10] sm:$0xf]
        %v871 = vld [vmem:[#allocation6 + $0x14] sm:$0xf]
        %v872 = vld [vmem:[#allocation6 + $0x18] sm:$0xf]
        %v873 = vld [vmem:[#allocation6 + $0x1c] sm:$0xf]
        %v874 = vld [vmem:[%s6] sm:$0x1]
        %v876 = vlaneseq
        %v877 = vshrl.u32 %v876, 7
        %v878 = vsub.s32 0, %v877
        %v879 = vrot.slane %v874, %v878
        %v883 = vunpack.c.l.b16 %v560
        %v884 = vunpack.c.l.b16 %v561
        %v885 = vrot.slane %v884, 7
        %vm886 = vcmask 1041409
        %v887 = vsel %vm886, %v885, %v883
        %v888 = vpack.c.b16 %v887, %v887
        %v897 = vunpack.c.l.b16 %v866
        %v898 = vunpack.c.l.b16 %v867
        %v899 = vunpack.c.l.b16 %v868
        %v900 = vunpack.c.l.b16 %v869
        %v901 = vunpack.c.l.b16 %v870
        %v902 = vunpack.c.l.b16 %v871
        %v903 = vunpack.c.l.b16 %v872
        %v904 = vunpack.c.l.b16 %v873
        %v905 = vpack.c.b16 %v898, %v897
        %v906 = vpack.c.b16 %v900, %v899
        %v907 = vpack.c.b16 %v902, %v901
        %v908 = vpack.c.b16 %v904, %v903
        %v914 = vsel %vm532, %v888, 0
        %916 = vmatprep.subr.bf16.mxu0 0
        %917 = vmatpush1.bf16.msra.mxu0 0
        %918 = vmatprep.subr.bf16.mxu0 0
        %919 = vmatpush1.bf16.msra.mxu0 0
        %920 = vmatprep.subr.bf16.mxu0 0
        %921 = vmatpush1.bf16.msra.mxu0 0
        %922 = vmatprep.subr.bf16.mxu0 0
        %923 = vmatpush1.bf16.msra.mxu0 0
        %924 = vmatprep.subr.bf16.mxu0 0
        %925 = vmatpush1.bf16.msra.mxu0 %v908
        %926 = vmatprep.subr.bf16.mxu0 0
        %927 = vmatpush1.bf16.msra.mxu0 %v907
        %928 = vmatprep.subr.bf16.mxu0 0
        %929 = vmatpush1.bf16.msra.mxu0 %v906
        %930 = vmatprep.subr.bf16.mxu0 0
        %931 = vmatpush1.bf16.msra.mxu0 %v905
        %932 = vmatprep.subr.bf16.mxu0 0
        %933 = vmatpush2.bf16.msra.mxu0 0
        %934 = vmatprep.subr.bf16.mxu0 0
        %935 = vmatpush2.bf16.msra.mxu0 0
        %936 = vmatprep.subr.bf16.mxu0 0
        %937 = vmatpush2.bf16.msra.mxu0 0
        %938 = vmatprep.subr.bf16.mxu0 0
        %939 = vmatpush2.bf16.msra.mxu0 0
        %940 = vmatprep.subr.bf16.mxu0 0
        %941 = vmatpush2.bf16.msra.mxu0 0
        %942 = vmatprep.subr.bf16.mxu0 0
        %943 = vmatpush2.bf16.msra.mxu0 0
        %944 = vmatprep.subr.bf16.mxu0 0
        %945 = vmatpush2.bf16.msra.mxu0 0
        %946 = vmatprep.subr.bf16.mxu0 0
        %947 = vmatpush2.bf16.msra.mxu0 0
        %948 = vmatprep.mubr.bf16.mxu0 0
        %949 = vmatmul.mubr.bf16.gmra.mxu0 %v914
        %v950 = vpop.f32.mrf.mxu0
        %v951 = vadd.f32 %v879, %v950
        %v952 = vpop.f32.mrf.mxu0
        %v953 = vpop.f32.mrf.mxu0
        %v954 = vpop.f32.mrf.mxu0
        %955 = vdwg.mxu0
        %v956 = vmul.f32 %v951, 0.25
        %v959 = vunpack.c.l.s4 1966171168
        %v960 = vunpack.c.0.s8 %v959
        %v961 = vlaneseq
        %v962 = vshrl.u32 %v961, 7
        %v963 = vsub.s32 %v960, %v962
        %v964 = vrot.slane %v956, %v963
        %v965 = vcombine.high %v964, %v964
        %v967 = vunpack.c.l.s4 1966171168
        %v968 = vunpack.c.0.s8 %v967
        %v969 = vlaneseq
        %v970 = vshrl.u32 %v969, 7
        %v971 = vsub.s32 %v968, %v970
        %v972 = vrot.slane %v964, %v971
        %v974 = vunpack.c.l.s4 1966171168
        %v975 = vunpack.c.0.s8 %v974
        %v976 = vlaneseq
        %v977 = vshrl.u32 %v976, 7
        %v978 = vsub.s32 %v975, %v977
        %v979 = vrot.slane %v965, %v978
        %v980 = vlaneseq
        %v981 = vshrl.u32 %v980, 7
        %v982 = vsub.s32 0, %v981
        %v983 = vrot.slane %v972, %v982
        %v984 = vlaneseq
        %v985 = vshrl.u32 %v984, 7
        %v986 = vsub.s32 0, %v985
        %v987 = vrot.slane %v979, %v986
        %v990 = vmul.f32 %v732, %v983
        %v991 = vmul.f32 %v735, %v983
        %v992 = vmul.f32 %v740, %v983
        %v993 = vmul.f32 %v743, %v983
        %v994 = vmul.f32 %v748, %v987
        %v995 = vmul.f32 %v751, %v987
        %v996 = vmul.f32 %v756, %v987
        %v997 = vmul.f32 %v759, %v987
        %v998 = vpack.c.bf16 %v991, %v990
        %v999 = vpack.c.bf16 %v993, %v992
        %v1000 = vpack.c.bf16 %v995, %v994
        %v1001 = vpack.c.bf16 %v997, %v996
        %v1002 = vld [vmem:[%s3] sm:$0xf]
        %v1003 = vld [vmem:[%s3 + $0x4] sm:$0xf]
        %v1004 = vld [vmem:[%s3 + $0x8] sm:$0xf]
        %v1005 = vld [vmem:[%s3 + $0xc] sm:$0xf]
        %v1006 = vld [vmem:[%s3 + $0x10] sm:$0xf]
        %v1007 = vld [vmem:[%s3 + $0x14] sm:$0xf]
        %v1008 = vld [vmem:[%s3 + $0x18] sm:$0xf]
        %v1009 = vld [vmem:[%s3 + $0x1c] sm:$0xf]
        %v1018 = vunpack.c.l.b16 %v1002
        %v1019 = vunpack.c.l.b16 %v1003
        %v1020 = vunpack.c.l.b16 %v1004
        %v1021 = vunpack.c.l.b16 %v1005
        %v1022 = vunpack.c.l.b16 %v1006
        %v1023 = vunpack.c.l.b16 %v1007
        %v1024 = vunpack.c.l.b16 %v1008
        %v1025 = vunpack.c.l.b16 %v1009
        %v1026 = vpack.c.b16 %v1019, %v1018
        %v1027 = vpack.c.b16 %v1021, %v1020
        %v1028 = vpack.c.b16 %v1023, %v1022
        %v1029 = vpack.c.b16 %v1025, %v1024
        %v1035 = vsel %vm532, %v998, 0
        %v1038 = vsel %vm532, %v999, 0
        %v1041 = vsel %vm532, %v1000, 0
        %v1044 = vsel %vm532, %v1001, 0
        %1046 = vmatprep.subr.bf16.mxu0 0
        %1047 = vmatpush1.bf16.msra.mxu0 0
        %1048 = vmatprep.subr.bf16.mxu0 0
        %1049 = vmatpush1.bf16.msra.mxu0 0
        %1050 = vmatprep.subr.bf16.mxu0 0
        %1051 = vmatpush1.bf16.msra.mxu0 0
        %1052 = vmatprep.subr.bf16.mxu0 0
        %1053 = vmatpush1.bf16.msra.mxu0 0
        %1054 = vmatprep.subr.bf16.mxu0 0
        %1055 = vmatpush1.bf16.msra.mxu0 %v1029
        %1056 = vmatprep.subr.bf16.mxu0 0
        %1057 = vmatpush1.bf16.msra.mxu0 %v1028
        %1058 = vmatprep.subr.bf16.mxu0 0
        %1059 = vmatpush1.bf16.msra.mxu0 %v1027
        %1060 = vmatprep.subr.bf16.mxu0 0
        %1061 = vmatpush1.bf16.msra.mxu0 %v1026
        %1062 = vmatprep.subr.bf16.mxu0 0
        %1063 = vmatpush2.bf16.msra.mxu0 0
        %1064 = vmatprep.subr.bf16.mxu0 0
        %1065 = vmatpush2.bf16.msra.mxu0 0
        %1066 = vmatprep.subr.bf16.mxu0 0
        %1067 = vmatpush2.bf16.msra.mxu0 0
        %1068 = vmatprep.subr.bf16.mxu0 0
        %1069 = vmatpush2.bf16.msra.mxu0 0
        %1070 = vmatprep.subr.bf16.mxu0 0
        %1071 = vmatpush2.bf16.msra.mxu0 0
        %1072 = vmatprep.subr.bf16.mxu0 0
        %1073 = vmatpush2.bf16.msra.mxu0 0
        %1074 = vmatprep.subr.bf16.mxu0 0
        %1075 = vmatpush2.bf16.msra.mxu0 0
        %1076 = vmatprep.subr.bf16.mxu0 0
        %1077 = vmatpush2.bf16.msra.mxu0 0
        %1078 = vmatprep.mubr.bf16.mxu0 0
        %1079 = vmatmul.mubr.bf16.gmra.mxu0 %v1035
        %v1080 = vpop.f32.mrf.mxu0
        %v1081 = vadd.f32 0.0, %v1080
        %v1082 = vpop.f32.mrf.mxu0
        %v1083 = vpop.f32.mrf.mxu0
        %v1084 = vadd.f32 0.0, %v1083
        %v1085 = vpop.f32.mrf.mxu0
        %1086 = vmatprep.mubr.bf16.mxu0 0
        %1087 = vmatmul.mubr.bf16.gmra.mxu0 %v1038
        %v1088 = vpop.f32.mrf.mxu0
        %v1089 = vadd.f32 0.0, %v1088
        %v1090 = vpop.f32.mrf.mxu0
        %v1091 = vpop.f32.mrf.mxu0
        %v1092 = vadd.f32 0.0, %v1091
        %v1093 = vpop.f32.mrf.mxu0
        %1094 = vmatprep.mubr.bf16.mxu0 0
        %1095 = vmatmul.mubr.bf16.gmra.mxu0 %v1041
        %v1096 = vpop.f32.mrf.mxu0
        %v1097 = vadd.f32 0.0, %v1096
        %v1098 = vpop.f32.mrf.mxu0
        %v1099 = vpop.f32.mrf.mxu0
        %v1100 = vadd.f32 0.0, %v1099
        %v1101 = vpop.f32.mrf.mxu0
        %1102 = vmatprep.mubr.bf16.mxu0 0
        %1103 = vmatmul.mubr.bf16.gmra.mxu0 %v1044
        %v1104 = vpop.f32.mrf.mxu0
        %v1105 = vadd.f32 0.0, %v1104
        %v1106 = vpop.f32.mrf.mxu0
        %v1107 = vpop.f32.mrf.mxu0
        %v1108 = vadd.f32 0.0, %v1107
        %v1109 = vpop.f32.mrf.mxu0
        %1110 = vdwg.mxu0
        %v1111 = vld [vmem:[%s2] sm:$0xff]
        %v1112 = vld [vmem:[%s2 + $0x8] sm:$0xff]
        %v1113 = vld [vmem:[%s2 + $0x10] sm:$0xff]
        %v1114 = vld [vmem:[%s2 + $0x18] sm:$0xff]
        %v1115 = vadd.f32 %v1081, %v1111
        %v1116 = vadd.f32 %v1084, %v1112
        %v1117 = vadd.f32 %v1089, %v1113
        %v1118 = vadd.f32 %v1092, %v1114
        %v1119 = vadd.f32 %v1097, %v1111
        %v1120 = vadd.f32 %v1100, %v1112
        %v1121 = vadd.f32 %v1105, %v1113
        %v1122 = vadd.f32 %v1108, %v1114
        %v1123 = vmax.f32 %v1115, %v1117
        %v1124 = vmax.f32 %v1116, %v1118
        %v1125 = vmax.f32 %v1123, %v1124
        %v1126 = vrot.slane %v1125, 4
        %v1127 = vmax.f32 %v1125, %v1126
        %v1128 = vrot.slane %v1127, 2
        %v1129 = vmax.f32 %v1127, %v1128
        %v1130 = vrot.slane %v1129, 1
        %v1131 = vmax.f32 %v1129, %v1130
        %v1132 = vmax.f32 %v1119, %v1121
        %v1133 = vmax.f32 %v1120, %v1122
        %v1134 = vmax.f32 %v1132, %v1133
        %v1135 = vrot.slane %v1134, 4
        %v1136 = vmax.f32 %v1134, %v1135
        %v1137 = vrot.slane %v1136, 2
        %v1138 = vmax.f32 %v1136, %v1137
        %v1139 = vrot.slane %v1138, 1
        %v1140 = vmax.f32 %v1138, %v1139
        %v1141 = vsub.f32 %v1115, %v1131
        %v1142 = vsub.f32 %v1116, %v1131
        %v1143 = vsub.f32 %v1117, %v1131
        %v1144 = vsub.f32 %v1118, %v1131
        %v1145 = vsub.f32 %v1119, %v1140
        %v1146 = vsub.f32 %v1120, %v1140
        %v1147 = vsub.f32 %v1121, %v1140
        %v1148 = vsub.f32 %v1122, %v1140
        %v1149 = vmul.f32 %v1141, 1.442695
        %v1150 = vpow.pop %v1149
        %v1151 = vmul.f32 %v1142, 1.442695
        %v1152 = vpow.pop %v1151
        %v1153 = vmul.f32 %v1143, 1.442695
        %v1154 = vpow.pop %v1153
        %v1155 = vmul.f32 %v1144, 1.442695
        %v1156 = vpow.pop %v1155
        %v1157 = vmul.f32 %v1145, 1.442695
        %v1158 = vpow.pop %v1157
        %v1159 = vmul.f32 %v1146, 1.442695
        %v1160 = vpow.pop %v1159
        %v1161 = vmul.f32 %v1147, 1.442695
        %v1162 = vpow.pop %v1161
        %v1163 = vmul.f32 %v1148, 1.442695
        %v1164 = vpow.pop %v1163
        %v1165 = vadd.f32 %v1150, %v1152
        %v1166 = vadd.f32 %v1165, %v1154
        %v1167 = vadd.f32 %v1166, %v1156
        %v1168 = vrot.slane %v1167, 4
        %v1169 = vadd.f32 %v1167, %v1168
        %v1170 = vrot.slane %v1169, 2
        %v1171 = vadd.f32 %v1169, %v1170
        %v1172 = vrot.slane %v1171, 1
        %v1173 = vadd.f32 %v1171, %v1172
        %v1174 = vadd.f32 %v1158, %v1160
        %v1175 = vadd.f32 %v1174, %v1162
        %v1176 = vadd.f32 %v1175, %v1164
        %v1177 = vrot.slane %v1176, 4
        %v1178 = vadd.f32 %v1176, %v1177
        %v1179 = vrot.slane %v1178, 2
        %v1180 = vadd.f32 %v1178, %v1179
        %v1181 = vrot.slane %v1180, 1
        %v1182 = vadd.f32 %v1180, %v1181
        %v1183 = vrcp.pop %v1173
        %v1184 = vrcp.pop %v1182
        %v1185 = vmul.f32 %v1150, %v1183
        %v1186 = vmul.f32 %v1152, %v1183
        %v1187 = vmul.f32 %v1154, %v1183
        %v1188 = vmul.f32 %v1156, %v1183
        %v1189 = vmul.f32 %v1158, %v1184
        %v1190 = vmul.f32 %v1160, %v1184
        %v1191 = vmul.f32 %v1162, %v1184
        %v1192 = vmul.f32 %v1164, %v1184
        %v1193 = vpack.c.bf16 %v1186, %v1185
        %v1194 = vpack.c.bf16 %v1188, %v1187
        %v1195 = vpack.c.bf16 %v1190, %v1189
        %v1196 = vpack.c.bf16 %v1192, %v1191
        %v1197 = vld [vmem:[%s4] sm:$0xf]
        %v1198 = vld [vmem:[%s4 + $0x4] sm:$0xf]
        %v1199 = vld [vmem:[%s4 + $0x8] sm:$0xf]
        %v1200 = vld [vmem:[%s4 + $0xc] sm:$0xf]
        %v1201 = vld [vmem:[%s4 + $0x10] sm:$0xf]
        %v1202 = vld [vmem:[%s4 + $0x14] sm:$0xf]
        %v1203 = vld [vmem:[%s4 + $0x18] sm:$0xf]
        %v1204 = vld [vmem:[%s4 + $0x1c] sm:$0xf]
        %v1205 = vld [vmem:[%s4 + $0x20] sm:$0xf]
        %v1206 = vld [vmem:[%s4 + $0x24] sm:$0xf]
        %v1207 = vld [vmem:[%s4 + $0x28] sm:$0xf]
        %v1208 = vld [vmem:[%s4 + $0x2c] sm:$0xf]
        %v1209 = vld [vmem:[%s4 + $0x30] sm:$0xf]
        %v1210 = vld [vmem:[%s4 + $0x34] sm:$0xf]
        %v1211 = vld [vmem:[%s4 + $0x38] sm:$0xf]
        %v1212 = vld [vmem:[%s4 + $0x3c] sm:$0xf]
        %v1229 = vunpack.c.l.b16 %v1197
        %v1230 = vunpack.c.l.b16 %v1198
        %v1231 = vunpack.c.l.b16 %v1199
        %v1232 = vunpack.c.l.b16 %v1200
        %v1233 = vunpack.c.l.b16 %v1201
        %v1234 = vunpack.c.l.b16 %v1202
        %v1235 = vunpack.c.l.b16 %v1203
        %v1236 = vunpack.c.l.b16 %v1204
        %v1237 = vunpack.c.l.b16 %v1205
        %v1238 = vunpack.c.l.b16 %v1206
        %v1239 = vunpack.c.l.b16 %v1207
        %v1240 = vunpack.c.l.b16 %v1208
        %v1241 = vunpack.c.l.b16 %v1209
        %v1242 = vunpack.c.l.b16 %v1210
        %v1243 = vunpack.c.l.b16 %v1211
        %v1244 = vunpack.c.l.b16 %v1212
        %v1245 = vpack.c.b16 %v1230, %v1229
        %v1246 = vpack.c.b16 %v1232, %v1231
        %v1247 = vpack.c.b16 %v1234, %v1233
        %v1248 = vpack.c.b16 %v1236, %v1235
        %v1249 = vpack.c.b16 %v1238, %v1237
        %v1250 = vpack.c.b16 %v1240, %v1239
        %v1251 = vpack.c.b16 %v1242, %v1241
        %v1252 = vpack.c.b16 %v1244, %v1243
        %1261 = vmatprep.subr.bf16.mxu0 0
        %1262 = vmatpush1.bf16.msra.mxu0 %v1252
        %1263 = vmatprep.subr.bf16.mxu0 0
        %1264 = vmatpush1.bf16.msra.mxu0 %v1251
        %1265 = vmatprep.subr.bf16.mxu0 0
        %1266 = vmatpush1.bf16.msra.mxu0 %v1250
        %1267 = vmatprep.subr.bf16.mxu0 0
        %1268 = vmatpush1.bf16.msra.mxu0 %v1249
        %1269 = vmatprep.subr.bf16.mxu0 0
        %1270 = vmatpush1.bf16.msra.mxu0 %v1248
        %1271 = vmatprep.subr.bf16.mxu0 0
        %1272 = vmatpush1.bf16.msra.mxu0 %v1247
        %1273 = vmatprep.subr.bf16.mxu0 0
        %1274 = vmatpush1.bf16.msra.mxu0 %v1246
        %1275 = vmatprep.subr.bf16.mxu0 0
        %1276 = vmatpush1.bf16.msra.mxu0 %v1245
        %1277 = vmatprep.subr.bf16.mxu0 0
        %1278 = vmatpush2.bf16.msra.mxu0 0
        %1279 = vmatprep.subr.bf16.mxu0 0
        %1280 = vmatpush2.bf16.msra.mxu0 0
        %1281 = vmatprep.subr.bf16.mxu0 0
        %1282 = vmatpush2.bf16.msra.mxu0 0
        %1283 = vmatprep.subr.bf16.mxu0 0
        %1284 = vmatpush2.bf16.msra.mxu0 0
        %1285 = vmatprep.subr.bf16.mxu0 0
        %1286 = vmatpush2.bf16.msra.mxu0 0
        %1287 = vmatprep.subr.bf16.mxu0 0
        %1288 = vmatpush2.bf16.msra.mxu0 0
        %1289 = vmatprep.subr.bf16.mxu0 0
        %1290 = vmatpush2.bf16.msra.mxu0 0
        %1291 = vmatprep.subr.bf16.mxu0 0
        %1292 = vmatpush2.bf16.msra.mxu0 0
        %1293 = vmatprep.mubr.bf16.mxu0 0
        %1294 = vmatmul.mubr.bf16.gmra.mxu0 %v1193
        %v1295 = vpop.f32.mrf.mxu0
        %v1296 = vadd.f32 0.0, %v1295
        %v1297 = vpop.f32.mrf.mxu0
        %v1298 = vpop.f32.mrf.mxu0
        %v1299 = vadd.f32 0.0, %v1298
        %v1300 = vpop.f32.mrf.mxu0
        %1301 = vmatprep.mubr.bf16.mxu0 0
        %1302 = vmatmul.mubr.bf16.gmra.mxu0 %v1194
        %v1303 = vpop.f32.mrf.mxu0
        %v1304 = vadd.f32 0.0, %v1303
        %v1305 = vpop.f32.mrf.mxu0
        %v1306 = vpop.f32.mrf.mxu0
        %v1307 = vadd.f32 0.0, %v1306
        %v1308 = vpop.f32.mrf.mxu0
        %1309 = vmatprep.mubr.bf16.mxu0 0
        %1310 = vmatmul.mubr.bf16.gmra.mxu0 %v1195
        %v1311 = vpop.f32.mrf.mxu0
        %v1312 = vadd.f32 0.0, %v1311
        %v1313 = vpop.f32.mrf.mxu0
        %v1314 = vpop.f32.mrf.mxu0
        %v1315 = vadd.f32 0.0, %v1314
        %v1316 = vpop.f32.mrf.mxu0
        %1317 = vmatprep.mubr.bf16.mxu0 0
        %1318 = vmatmul.mubr.bf16.gmra.mxu0 %v1196
        %v1319 = vpop.f32.mrf.mxu0
        %v1320 = vadd.f32 0.0, %v1319
        %v1321 = vpop.f32.mrf.mxu0
        %v1322 = vpop.f32.mrf.mxu0
        %v1323 = vadd.f32 0.0, %v1322
        %v1324 = vpop.f32.mrf.mxu0
        %1325 = vdwg.mxu0
        %v1326 = vmul.f32 %v1296, %v836
        %v1327 = vmul.f32 %v1299, %v839
        %v1328 = vmul.f32 %v1304, %v844
        %v1329 = vmul.f32 %v1307, %v847
        %v1330 = vmul.f32 %v1312, %v852
        %v1331 = vmul.f32 %v1315, %v855
        %v1332 = vmul.f32 %v1320, %v860
        %v1333 = vmul.f32 %v1323, %v863
        %v1334 = vsel %vm532, %v1326, 0.0
        %v1335 = vsel %vm532, %v1327, 0.0
        %v1336 = vadd.f32 %v1334, %v1335
        %v1337 = vsel %vm532, %v1328, 0.0
        %v1338 = vadd.f32 %v1336, %v1337
        %v1339 = vsel %vm532, %v1329, 0.0
        %v1340 = vadd.f32 %v1338, %v1339
        %v1341 = vrot.slane %v1340, 4
        %v1342 = vadd.f32 %v1340, %v1341
        %v1343 = vrot.slane %v1342, 2
        %v1344 = vadd.f32 %v1342, %v1343
        %v1345 = vrot.slane %v1344, 1
        %v1346 = vadd.f32 %v1344, %v1345
        %v1347 = vsel %vm532, %v1330, 0.0
        %v1348 = vsel %vm532, %v1331, 0.0
        %v1349 = vadd.f32 %v1347, %v1348
        %v1350 = vsel %vm532, %v1332, 0.0
        %v1351 = vadd.f32 %v1349, %v1350
        %v1352 = vsel %vm532, %v1333, 0.0
        %v1353 = vadd.f32 %v1351, %v1352
        %v1354 = vrot.slane %v1353, 4
        %v1355 = vadd.f32 %v1353, %v1354
        %v1356 = vrot.slane %v1355, 2
        %v1357 = vadd.f32 %v1355, %v1356
        %v1358 = vrot.slane %v1357, 1
        %v1359 = vadd.f32 %v1357, %v1358
        %v1360 = vpack.c.bf16 %v1346, %v1346
        %v1361 = vpack.c.bf16 %v1359, %v1359
        %v1362 = vld [vmem:[#allocation11] sm:$0xf]
        %v1363 = vld [vmem:[#allocation11 + $0x4] sm:$0xf]
        %v1364 = vld [vmem:[#allocation11 + $0x8] sm:$0xf]
        %v1365 = vld [vmem:[#allocation11 + $0xc] sm:$0xf]
        %v1366 = vld [vmem:[#allocation11 + $0x10] sm:$0xf]
        %v1367 = vld [vmem:[#allocation11 + $0x14] sm:$0xf]
        %v1368 = vld [vmem:[#allocation11 + $0x18] sm:$0xf]
        %v1369 = vld [vmem:[#allocation11 + $0x1c] sm:$0xf]
        %v1370 = vld [vmem:[%s12] sm:$0x1]
        %v1372 = vlaneseq
        %v1373 = vshrl.u32 %v1372, 7
        %v1374 = vsub.s32 0, %v1373
        %v1375 = vrot.slane %v1370, %v1374
        %v1379 = vunpack.c.l.b16 %v1360
        %v1380 = vunpack.c.l.b16 %v1361
        %v1381 = vsel %vm886, %v1380, %v1379
        %v1382 = vpack.c.b16 %v1381, %v1381
        %v1391 = vunpack.c.l.b16 %v1362
        %v1392 = vunpack.c.l.b16 %v1363
        %v1393 = vunpack.c.l.b16 %v1364
        %v1394 = vunpack.c.l.b16 %v1365
        %v1395 = vunpack.c.l.b16 %v1366
        %v1396 = vunpack.c.l.b16 %v1367
        %v1397 = vunpack.c.l.b16 %v1368
        %v1398 = vunpack.c.l.b16 %v1369
        %v1399 = vpack.c.b16 %v1392, %v1391
        %v1400 = vpack.c.b16 %v1394, %v1393
        %v1401 = vpack.c.b16 %v1396, %v1395
        %v1402 = vpack.c.b16 %v1398, %v1397
        %v1408 = vsel %vm532, %v1382, 0
        %1410 = vmatprep.subr.bf16.mxu0 0
        %1411 = vmatpush1.bf16.msra.mxu0 0
        %1412 = vmatprep.subr.bf16.mxu0 0
        %1413 = vmatpush1.bf16.msra.mxu0 0
        %1414 = vmatprep.subr.bf16.mxu0 0
        %1415 = vmatpush1.bf16.msra.mxu0 0
        %1416 = vmatprep.subr.bf16.mxu0 0
        %1417 = vmatpush1.bf16.msra.mxu0 0
        %1418 = vmatprep.subr.bf16.mxu0 0
        %1419 = vmatpush1.bf16.msra.mxu0 %v1402
        %1420 = vmatprep.subr.bf16.mxu0 0
        %1421 = vmatpush1.bf16.msra.mxu0 %v1401
        %1422 = vmatprep.subr.bf16.mxu0 0
        %1423 = vmatpush1.bf16.msra.mxu0 %v1400
        %1424 = vmatprep.subr.bf16.mxu0 0
        %1425 = vmatpush1.bf16.msra.mxu0 %v1399
        %1426 = vmatprep.subr.bf16.mxu0 0
        %1427 = vmatpush2.bf16.msra.mxu0 0
        %1428 = vmatprep.subr.bf16.mxu0 0
        %1429 = vmatpush2.bf16.msra.mxu0 0
        %1430 = vmatprep.subr.bf16.mxu0 0
        %1431 = vmatpush2.bf16.msra.mxu0 0
        %1432 = vmatprep.subr.bf16.mxu0 0
        %1433 = vmatpush2.bf16.msra.mxu0 0
        %1434 = vmatprep.subr.bf16.mxu0 0
        %1435 = vmatpush2.bf16.msra.mxu0 0
        %1436 = vmatprep.subr.bf16.mxu0 0
        %1437 = vmatpush2.bf16.msra.mxu0 0
        %1438 = vmatprep.subr.bf16.mxu0 0
        %1439 = vmatpush2.bf16.msra.mxu0 0
        %1440 = vmatprep.subr.bf16.mxu0 0
        %1441 = vmatpush2.bf16.msra.mxu0 0
        %1442 = vmatprep.mubr.bf16.mxu0 0
        %1443 = vmatmul.mubr.bf16.gmra.mxu0 %v1408
        %v1444 = vpop.f32.mrf.mxu0
        %v1445 = vadd.f32 %v1375, %v1444
        %v1446 = vpop.f32.mrf.mxu0
        %v1447 = vpop.f32.mrf.mxu0
        %v1448 = vpop.f32.mrf.mxu0
        %1449 = vdwg.mxu0
        %1450 = vst [vmem:[%s509] sm:$0x3] %v1445
        %s1451 = sand.u32 %s316, 1
        %s1452 = scalar_lea.sflag [#allocation5], %s1451
        %s1453 = sand.u32 %s316, 1
        %s1454 = smul.addr %s1453, 2
        %s1455 = scalar_lea.vmem [#allocation12], %s1454
        // Predicated region
        $region93: #{tpu_custom_call.1} parent=71 // pred_check
          %p1456 = pneg %p326
        $region94: #{tpu_custom_call.1} parent=71 // pred_check_branch
          %1458 = sbr.rel (%p1456) target = $region96
        $region95: #{tpu_custom_call.1} parent=71 // pred_region
          %s1460 = ssub.s32 32, 32
          %1461 = vsyncadd %s1452, %s1460
          %s1462 = smul.addr %s30, 32
          %s1463 = scalar_lea.hbm %s13, %s1462
          %s1465 = sshll.u32 %s1455, 4
          %s1466 = int_to_ptr.vmem [resolvable:$true] %s1465
          %1468 = dma.vmem_to_hbm [thread:$0]  %s1466, 32, %s1463, %s1452
        $region96: #{tpu_custom_call.1} parent=71 // pred_fallthru
          _
      $region72: #{tpu_custom_call.1} parent=5 // pred_fallthru
        _
      %p1469 = scmp.le.s32.totalorder 2, %s25
      // Predicated region
      $region97: #{tpu_custom_call.1} parent=5 // pred_check
        %p1470 = pneg %p1469
      $region98: #{tpu_custom_call.1} parent=5 // pred_check_branch
        %1472 = sbr.rel (%p1470) target = $region100
      $region99: #{tpu_custom_call.1} parent=5 // pred_region
        %s1473 = ssub.s32 %s25, 2
        // Predicated region
        $region101: #{tpu_custom_call.1} parent=99 // pred_check
          %p1474 = pneg %p332
        $region102: #{tpu_custom_call.1} parent=99 // pred_check_branch
          %1476 = sbr.rel (%p1474) target = $region104
        $region103: #{tpu_custom_call.1} parent=99 // pred_region
          %s1477 = sand.u32 %s317, 1
          %s1478 = scalar_lea.sflag [#allocation5], %s1477
          %s1479 = sand.u32 %s317, 1
          %s1480 = smul.addr %s1479, 2
          %s1481 = scalar_lea.vmem [#allocation12], %s1480
          %1482 = dma.done %s1478, 32
        $region104: #{tpu_custom_call.1} parent=99 // pred_fallthru
          _
      $region100: #{tpu_custom_call.1} parent=5 // pred_fallthru
        _
    $region6: #{tpu_custom_call.1} parent=1 // loop_footer
      %s29 = sadd.s32 1, %s25
    $region7: #{tpu_custom_call.1} parent=1 // loop_footer_branch
      %24 = sbr.rel target = $region3
    $region8: #{tpu_custom_call.1} parent=1 // loop_exit
      _
    %1483 = vsyncpa [#allocation4], 1
    %s1484 = scalar_lea.sflag [#allocation4], 1
    %1485 = vsyncpa %s1484, 1
    %1486 = vsyncpa [#allocation7], 1
    %1487 = vsyncpa [#allocation10], 1
    %1488 = vsyncpa [#allocation5], 1
    %s1489 = scalar_lea.sflag [#allocation5], 1
    %1490 = vsyncpa %s1489, 1

</llo_original>
